<compile_context>
chip_gen: v7x
topology: tpu7x:2x2x1
jax: 0.10.0
libtpu: 0.0.40
codegen_flags: <defaults>
</compile_context>

<pallas_src>
import functools

import jax
import jax.numpy as jnp
from jax.experimental import pallas as pl
from jax.experimental.pallas import tpu as pltpu

LANE = 128


def _round_up(a, b):
    return (a + b - 1) // b * b


def _sublane_multiple(dtype):
    # Min second-to-last tile dim per dtype: f32 -> 8, bf16 -> 16, int8/fp8 -> 32.
    return {4: 8, 2: 16, 1: 32}.get(jnp.dtype(dtype).itemsize, 8)


def _interleave_kernel(x_ref, o_ref, *, w_1, w_2):
    # x_ref: (tm, 128) lane-dense input tile (VMEM)
    # o_ref: (tm, 256) lane-interleaved output tile: [w1*x, w2*x, w1*x, ...]
    x = x_ref[...]                       # full-width vector loads
    y0 = x * w_1                         # pure VPU; weights are immediates
    y1 = x * w_2
    tm, lanes = x.shape
    o_ref[...] = jnp.stack([y0, y1], axis=-1).reshape(tm, 2 * lanes)


def _slab_kernel(x_ref, o_ref, *, w_1, w_2):
    # Fallback layout: o_ref (2, tm, 128); plane 0 = w1*x, plane 1 = w2*x.
    x = x_ref[...]
    o_ref[0] = x * w_1
    o_ref[1] = x * w_2


_interleave_ok_cache = {}


def _interleave_supported(dtype, sub):
    """Probe (once per dtype) whether the in-kernel lane interleave lowers and
    produces the correct element order on this backend."""
    key = jnp.dtype(dtype)
    if key in _interleave_ok_cache:
        return _interleave_ok_cache[key]
    try:
        x = jnp.ones((sub, LANE), dtype)
        fn = pl.pallas_call(
            functools.partial(_interleave_kernel, w_1=1.0, w_2=2.0),
            out_shape=jax.ShapeDtypeStruct((sub, 2 * LANE), dtype),
            grid=(1,),
            in_specs=[pl.BlockSpec((sub, LANE), lambda i: (i, 0))],
            out_specs=pl.BlockSpec((sub, 2 * LANE), lambda i: (i, 0)),
        )
        out = jax.block_until_ready(fn(x)).reshape(-1, 2).astype(jnp.float32)
        expect = jnp.broadcast_to(jnp.array([1.0, 2.0], jnp.float32), out.shape)
        ok = bool(jnp.allclose(out, expect, atol=1e-6))
    except Exception:
        ok = False
    _interleave_ok_cache[key] = ok
    return ok


def layer1_forward(x, w_1, w_2, tm_rows=2048):
    """x: (N, 1) (or (N,)); w_1, w_2: Python scalars.  Returns (N, 2)."""
    n = x.shape[0]
    dtype = x.dtype
    w_1 = float(w_1)
    w_2 = float(w_2)
    sub = _sublane_multiple(dtype)

    # Lane-dense packing of the single input column: (rows, 128).
    rows = max(sub, pl.cdiv(n, LANE))
    total = rows * LANE
    x_flat = x.reshape(-1)
    if total == n:
        x2d = x_flat.reshape(rows, LANE)                  # zero-copy reshape
    else:
        # Minimal pad (only up to the next 128-lane row / min tile).
        x2d = jnp.pad(x_flat, (0, total - n)).reshape(rows, LANE)

    # Tile rows: multiple of the dtype min sublane tile; capped so the parallel
    # grid has >=2 steps whenever possible (v7x has 2 TensorCores). The ragged
    # last block (rows % tm != 0) is masked by Pallas via grid = cdiv.
    tm = max(sub, min(tm_rows, _round_up(pl.cdiv(rows, 2), sub)))
    grid = (pl.cdiv(rows, tm),)
    cparams = pltpu.CompilerParams(
        dimension_semantics=("parallel",),
        vmem_limit_bytes=32 * 1024 * 1024,
    )

    if _interleave_supported(dtype, sub):
        out2d = pl.pallas_call(
            functools.partial(_interleave_kernel, w_1=w_1, w_2=w_2),
            out_shape=jax.ShapeDtypeStruct((rows, 2 * LANE), dtype),
            grid=grid,
            in_specs=[pl.BlockSpec((tm, LANE), lambda i: (i, 0))],
            out_specs=pl.BlockSpec((tm, 2 * LANE), lambda i: (i, 0)),
            compiler_params=cparams,
        )(x2d)
        out = out2d.reshape(total, 2)      # zero-copy: flat order is already (N_pad, 2)
        return out if total == n else out[:n]

    # Fallback: dense (2, rows, 128) slab + XLA transpose back to (N, 2).
    out_slab = pl.pallas_call(
        functools.partial(_slab_kernel, w_1=w_1, w_2=w_2),
        out_shape=jax.ShapeDtypeStruct((2, rows, LANE), dtype),
        grid=grid,
        in_specs=[pl.BlockSpec((tm, LANE), lambda i: (i, 0))],
        out_specs=pl.BlockSpec((2, tm, LANE), lambda i: (0, i, 0)),
        compiler_params=cparams,
    )(x2d)
    return out_slab.reshape(2, total)[:, :n].T


if __name__ == "__main__":
    key = jax.random.PRNGKey(0)
    w_1, w_2 = 0.5, -1.25   # module scalars (nn.Parameter([[w_1]]), [[w_2]])

    # Small case consistent with the module: x is (N, 1) with last dim 1.
    n = 8
    x = jax.random.normal(key, (n, 1), dtype=jnp.float32)
    out = jax.block_until_ready(layer1_forward(x, w_1, w_2))
    ref = jnp.concatenate([x * w_1, x * w_2], axis=1)
    assert out.shape == (n, 2)
    assert jnp.allclose(out, ref, atol=1e-6), "mismatch vs reference (N=8)"

    # Ragged case (N not a multiple of 128): pad + masked-last-block path.
    n2 = 300
    x2 = jax.random.normal(jax.random.PRNGKey(1), (n2, 1), dtype=jnp.float32)
    out2 = jax.block_until_ready(layer1_forward(x2, w_1, w_2))
    ref2 = jnp.concatenate([x2 * w_1, x2 * w_2], axis=1)
    assert out2.shape == (n2, 2)
    assert jnp.allclose(out2, ref2, atol=1e-6), "mismatch vs reference (N=300)"

    # Aligned case: zero-copy input reshape, >=2 grid steps (both v7x cores).
    n3 = 128 * 64
    x3 = jax.random.normal(jax.random.PRNGKey(2), (n3, 1), dtype=jnp.float32)
    out3 = jax.block_until_ready(layer1_forward(x3, w_1, w_2))
    ref3 = jnp.concatenate([x3 * w_1, x3 * w_2], axis=1)
    assert out3.shape == (n3, 2)
    assert jnp.allclose(out3, ref3, atol=1e-6), "mismatch vs reference (N=8192)"

    print("KERNEL_OK")
</pallas_src>

<mosaic_0001>
module attributes {stable_mosaic.version = 11 : i64} {
  func.func @_interleave_kernel(%arg0: i32, %arg1: memref<8x128xf32, #tpu.memory_space<vmem>>, %arg2: memref<8x256xf32, #tpu.memory_space<vmem>>) attributes {dimension_semantics = [#tpu.dimension_semantics<arbitrary>], iteration_bounds = array<i64: 1>, scalar_prefetch = 0 : i64, scratch_operands = 0 : i64, tpu.core_type = #tpu.core_type<tc>, window_params = [{transform_indices = @transform_0, window_bounds = array<i64: 8, 128>}, {transform_indices = @transform_1, window_bounds = array<i64: 8, 256>}]} {
    %c0 = arith.constant 0 : index
    %c0_0 = arith.constant 0 : index
    %0 = vector.load %arg1[%c0, %c0_0] : memref<8x128xf32, #tpu.memory_space<vmem>>, vector<8x128xf32>
    %cst = arith.constant 1.000000e+00 : f32
    %1 = vector.broadcast %cst : f32 to vector<8x128xf32>
    %2 = arith.mulf %0, %1 : vector<8x128xf32>
    %cst_1 = arith.constant 2.000000e+00 : f32
    %3 = vector.broadcast %cst_1 : f32 to vector<8x128xf32>
    %4 = arith.mulf %0, %3 : vector<8x128xf32>
    %5 = vector.shape_cast %2 : vector<8x128xf32> to vector<8x128x1xf32>
    %6 = vector.shape_cast %4 : vector<8x128xf32> to vector<8x128x1xf32>
    %7 = tpu.concatenate %5, %6 in 2 : vector<8x128x1xf32>, vector<8x128x1xf32> -> vector<8x128x2xf32>
    %8 = vector.shape_cast %7 : vector<8x128x2xf32> to vector<8x256xf32>
    %c0_2 = arith.constant 0 : index
    %c0_3 = arith.constant 0 : index
    %9 = vector.load %arg2[%c0_2, %c0_3] : memref<8x256xf32, #tpu.memory_space<vmem>>, vector<8x256xf32>
    tpu.vector_store %arg2[%c0_2, %c0_3], %8 {strides = array<i32>} : memref<8x256xf32, #tpu.memory_space<vmem>>, vector<8x256xf32>,
    return
  }
  func.func @transform_0(%arg0: i32) -> (i32, i32) {
    %c0_i32 = arith.constant 0 : i32
    %c0_i32_0 = arith.constant 0 : i32
    return %arg0, %c0_i32 : i32, i32
  }
  func.func @transform_1(%arg0: i32) -> (i32, i32) {
    %c0_i32 = arith.constant 0 : i32
    %c0_i32_0 = arith.constant 0 : i32
    return %arg0, %c0_i32 : i32, i32
  }
}

module attributes {stable_mosaic.version = 11 : i64} {
  func.func @_slab_kernel(%arg0: i32, %arg1: memref<8x128xf32, #tpu.memory_space<vmem>>, %arg2: memref<2x8x128xf32, #tpu.memory_space<vmem>>) attributes {dimension_semantics = [#tpu.dimension_semantics<parallel>], iteration_bounds = array<i64: 1>, scalar_prefetch = 0 : i64, scratch_operands = 0 : i64, tpu.core_type = #tpu.core_type<tc>, window_params = [{transform_indices = @transform_0, window_bounds = array<i64: 8, 128>}, {transform_indices = @transform_1, window_bounds = array<i64: 2, 8, 128>}]} {
    %c0 = arith.constant 0 : index
    %c0_0 = arith.constant 0 : index
    %0 = vector.load %arg1[%c0, %c0_0] : memref<8x128xf32, #tpu.memory_space<vmem>>, vector<8x128xf32>
    %cst = arith.constant 5.000000e-01 : f32
    %1 = vector.broadcast %cst : f32 to vector<8x128xf32>
    %2 = arith.mulf %0, %1 : vector<8x128xf32>
    %c0_1 = arith.constant 0 : index
    %c0_2 = arith.constant 0 : index
    %c0_3 = arith.constant 0 : index
    %3 = vector.load %arg2[%c0_1, %c0_2, %c0_3] : memref<2x8x128xf32, #tpu.memory_space<vmem>>, vector<1x8x128xf32>
    %4 = vector.shape_cast %3 : vector<1x8x128xf32> to vector<8x128xf32>
    %5 = vector.shape_cast %2 : vector<8x128xf32> to vector<1x8x128xf32>
    tpu.vector_store %arg2[%c0_1, %c0_2, %c0_3], %5 {strides = array<i32>} : memref<2x8x128xf32, #tpu.memory_space<vmem>>, vector<1x8x128xf32>,
    %cst_4 = arith.constant -1.250000e+00 : f32
    %6 = vector.broadcast %cst_4 : f32 to vector<8x128xf32>
    %7 = arith.mulf %0, %6 : vector<8x128xf32>
    %c1 = arith.constant 1 : index
    %c0_5 = arith.constant 0 : index
    %c0_6 = arith.constant 0 : index
    %8 = vector.load %arg2[%c1, %c0_5, %c0_6] : memref<2x8x128xf32, #tpu.memory_space<vmem>>, vector<1x8x128xf32>
    %9 = vector.shape_cast %8 : vector<1x8x128xf32> to vector<8x128xf32>
    %10 = vector.shape_cast %7 : vector<8x128xf32> to vector<1x8x128xf32>
    tpu.vector_store %arg2[%c1, %c0_5, %c0_6], %10 {strides = array<i32>} : memref<2x8x128xf32, #tpu.memory_space<vmem>>, vector<1x8x128xf32>,
    return
  }
  func.func @transform_0(%arg0: i32) -> (i32, i32) {
    %c0_i32 = arith.constant 0 : i32
    %c0_i32_0 = arith.constant 0 : i32
    return %arg0, %c0_i32 : i32, i32
  }
  func.func @transform_1(%arg0: i32) -> (i32, i32, i32) {
    %c0_i32 = arith.constant 0 : i32
    %c0_i32_0 = arith.constant 0 : i32
    %c0_i32_1 = arith.constant 0 : i32
    return %c0_i32, %arg0, %c0_i32_0 : i32, i32, i32
  }
}

</mosaic_0001>

<llo_original>
// kernel: tpu_custom_call.1
$region0: #{tpu_custom_call.1}
  #allocation0 [shape = 'u32[]', space=smem, size = 0x4, offset = 0x4, fixed_abs, tag = 'smem constant byte address 0x4 - core index']
  #allocation1 [shape = 'u32[144,128]{1,0:T(1,128)}', space=vmem, size = 0x12000, scoped, tag = 'internal scratch']
  %s0 = inlined_call_operand.hbm [shape: f32[8,128], index: 0, kind: input, shape index: {}]
  %s1 = inlined_call_operand.hbm [shape: f32[8,256], index: 1, kind: output, shape index: {}]
  %s2 = sld [smem:[#allocation0]]
  $region18: #{tpu_custom_call.1} parent=0
    _
  %s4 = ssub.s32 1, %s2
  %s5 = scalar_select 0, %s4, %s2
  $region1: #{tpu_custom_call.1} parent=0
    #allocation2 [shape = 'u8[4096]{0}', space=vmem, size = 0x1000, scoped, tag = 'input window, operand 0, single buffered']
    #allocation3 [shape = 's32[1]{0}', space=sflag, size = 0x4, scoped, tag = 'scoped memory for tpu_custom_call.1']
    #allocation4 [shape = 's32[1]{0}', space=sflag, size = 0x4, scoped, tag = 'scoped memory for tpu_custom_call.1']
    #allocation5 [shape = 'u8[8192]{0}', space=vmem, size = 0x2000, scoped, tag = 'output window, operand 0, single buffered']
    %6 = vsyncpa [#allocation3], 0
    %7 = vsyncpa [#allocation4], 0
    // Predicated region
    $region2: #{tpu_custom_call.1} parent=1 // pred_check
      _
    $region3: #{tpu_custom_call.1} parent=1 // pred_check_branch
      %9 = sbr.rel (0) target = $region5
    $region4: #{tpu_custom_call.1} parent=1 // pred_region
      %s11 = ssub.s32 128, 128
      %12 = vsyncadd [#allocation3], %s11
      %s14 = sshll.u32 [#allocation2], 4
      %s15 = int_to_ptr.vmem [resolvable:$true] %s14
      %17 = dma.hbm_to_vmem [thread:$0]  %s0, 128, %s15, [#allocation3]
    $region5: #{tpu_custom_call.1} parent=1 // pred_fallthru
      _
    // Predicated region
    $region6: #{tpu_custom_call.1} parent=1 // pred_check
      _
    $region7: #{tpu_custom_call.1} parent=1 // pred_check_branch
      %19 = sbr.rel (0) target = $region9
    $region8: #{tpu_custom_call.1} parent=1 // pred_region
      %20 = dma.done [#allocation3], 128
    $region9: #{tpu_custom_call.1} parent=1 // pred_fallthru
      _
    %v21 = vld [vmem:[#allocation2] sm:$0xff]
    %v22 = vmul.f32 %v21, 2.0
    %v23 = vlaneseq
    %v24 = vshrl.u32 %v23, 7
    %v25 = vsub.s32 0, %v24
    %v26 = vrot.slane %v21, %v25
    %28 = vbcast.lane.b32.xlu0 %v26, 256
    %v29 = vpop.permute.xlu0 %28
    %s31 = sor.u32 256, 8
    %32 = vbcast.lane.b32.xlu0 %v26, %s31
    %v33 = vpop.permute.xlu0 %32
    %s35 = sor.u32 256, 16
    %36 = vbcast.lane.b32.xlu0 %v26, %s35
    %v37 = vpop.permute.xlu0 %36
    %s39 = sor.u32 256, 24
    %40 = vbcast.lane.b32.xlu0 %v26, %s39
    %v41 = vpop.permute.xlu0 %40
    %s43 = sor.u32 256, 32
    %44 = vbcast.lane.b32.xlu0 %v26, %s43
    %v45 = vpop.permute.xlu0 %44
    %s47 = sor.u32 256, 40
    %48 = vbcast.lane.b32.xlu0 %v26, %s47
    %v49 = vpop.permute.xlu0 %48
    %s51 = sor.u32 256, 48
    %52 = vbcast.lane.b32.xlu0 %v26, %s51
    %v53 = vpop.permute.xlu0 %52
    %s55 = sor.u32 256, 56
    %56 = vbcast.lane.b32.xlu0 %v26, %s55
    %v57 = vpop.permute.xlu0 %56
    %s59 = sor.u32 256, 64
    %60 = vbcast.lane.b32.xlu0 %v26, %s59
    %v61 = vpop.permute.xlu0 %60
    %s63 = sor.u32 256, 72
    %64 = vbcast.lane.b32.xlu0 %v26, %s63
    %v65 = vpop.permute.xlu0 %64
    %s67 = sor.u32 256, 80
    %68 = vbcast.lane.b32.xlu0 %v26, %s67
    %v69 = vpop.permute.xlu0 %68
    %s71 = sor.u32 256, 88
    %72 = vbcast.lane.b32.xlu0 %v26, %s71
    %v73 = vpop.permute.xlu0 %72
    %s75 = sor.u32 256, 96
    %76 = vbcast.lane.b32.xlu0 %v26, %s75
    %v77 = vpop.permute.xlu0 %76
    %s79 = sor.u32 256, 104
    %80 = vbcast.lane.b32.xlu0 %v26, %s79
    %v81 = vpop.permute.xlu0 %80
    %s83 = sor.u32 256, 112
    %84 = vbcast.lane.b32.xlu0 %v26, %s83
    %v85 = vpop.permute.xlu0 %84
    %s87 = sor.u32 256, 120
    %88 = vbcast.lane.b32.xlu0 %v26, %s87
    %v89 = vpop.permute.xlu0 %88
    %v90 = vlaneseq
    %v91 = vshrl.u32 %v90, 7
    %v92 = vsub.s32 1, %v91
    %v93 = vrot.slane %v21, %v92
    %95 = vbcast.lane.b32.xlu0 %v93, 256
    %v96 = vpop.permute.xlu0 %95
    %s98 = sor.u32 256, 8
    %99 = vbcast.lane.b32.xlu0 %v93, %s98
    %v100 = vpop.permute.xlu0 %99
    %s102 = sor.u32 256, 16
    %103 = vbcast.lane.b32.xlu0 %v93, %s102
    %v104 = vpop.permute.xlu0 %103
    %s106 = sor.u32 256, 24
    %107 = vbcast.lane.b32.xlu0 %v93, %s106
    %v108 = vpop.permute.xlu0 %107
    %s110 = sor.u32 256, 32
    %111 = vbcast.lane.b32.xlu0 %v93, %s110
    %v112 = vpop.permute.xlu0 %111
    %s114 = sor.u32 256, 40
    %115 = vbcast.lane.b32.xlu0 %v93, %s114
    %v116 = vpop.permute.xlu0 %115
    %s118 = sor.u32 256, 48
    %119 = vbcast.lane.b32.xlu0 %v93, %s118
    %v120 = vpop.permute.xlu0 %119
    %s122 = sor.u32 256, 56
    %123 = vbcast.lane.b32.xlu0 %v93, %s122
    %v124 = vpop.permute.xlu0 %123
    %s126 = sor.u32 256, 64
    %127 = vbcast.lane.b32.xlu0 %v93, %s126
    %v128 = vpop.permute.xlu0 %127
    %s130 = sor.u32 256, 72
    %131 = vbcast.lane.b32.xlu0 %v93, %s130
    %v132 = vpop.permute.xlu0 %131
    %s134 = sor.u32 256, 80
    %135 = vbcast.lane.b32.xlu0 %v93, %s134
    %v136 = vpop.permute.xlu0 %135
    %s138 = sor.u32 256, 88
    %139 = vbcast.lane.b32.xlu0 %v93, %s138
    %v140 = vpop.permute.xlu0 %139
    %s142 = sor.u32 256, 96
    %143 = vbcast.lane.b32.xlu0 %v93, %s142
    %v144 = vpop.permute.xlu0 %143
    %s146 = sor.u32 256, 104
    %147 = vbcast.lane.b32.xlu0 %v93, %s146
    %v148 = vpop.permute.xlu0 %147
    %s150 = sor.u32 256, 112
    %151 = vbcast.lane.b32.xlu0 %v93, %s150
    %v152 = vpop.permute.xlu0 %151
    %s154 = sor.u32 256, 120
    %155 = vbcast.lane.b32.xlu0 %v93, %s154
    %v156 = vpop.permute.xlu0 %155
    %v157 = vlaneseq
    %v158 = vshrl.u32 %v157, 7
    %v159 = vsub.s32 2, %v158
    %v160 = vrot.slane %v21, %v159
    %162 = vbcast.lane.b32.xlu0 %v160, 256
    %v163 = vpop.permute.xlu0 %162
    %s165 = sor.u32 256, 8
    %166 = vbcast.lane.b32.xlu0 %v160, %s165
    %v167 = vpop.permute.xlu0 %166
    %s169 = sor.u32 256, 16
    %170 = vbcast.lane.b32.xlu0 %v160, %s169
    %v171 = vpop.permute.xlu0 %170
    %s173 = sor.u32 256, 24
    %174 = vbcast.lane.b32.xlu0 %v160, %s173
    %v175 = vpop.permute.xlu0 %174
    %s177 = sor.u32 256, 32
    %178 = vbcast.lane.b32.xlu0 %v160, %s177
    %v179 = vpop.permute.xlu0 %178
    %s181 = sor.u32 256, 40
    %182 = vbcast.lane.b32.xlu0 %v160, %s181
    %v183 = vpop.permute.xlu0 %182
    %s185 = sor.u32 256, 48
    %186 = vbcast.lane.b32.xlu0 %v160, %s185
    %v187 = vpop.permute.xlu0 %186
    %s189 = sor.u32 256, 56
    %190 = vbcast.lane.b32.xlu0 %v160, %s189
    %v191 = vpop.permute.xlu0 %190
    %s193 = sor.u32 256, 64
    %194 = vbcast.lane.b32.xlu0 %v160, %s193
    %v195 = vpop.permute.xlu0 %194
    %s197 = sor.u32 256, 72
    %198 = vbcast.lane.b32.xlu0 %v160, %s197
    %v199 = vpop.permute.xlu0 %198
    %s201 = sor.u32 256, 80
    %202 = vbcast.lane.b32.xlu0 %v160, %s201
    %v203 = vpop.permute.xlu0 %202
    %s205 = sor.u32 256, 88
    %206 = vbcast.lane.b32.xlu0 %v160, %s205
    %v207 = vpop.permute.xlu0 %206
    %s209 = sor.u32 256, 96
    %210 = vbcast.lane.b32.xlu0 %v160, %s209
    %v211 = vpop.permute.xlu0 %210
    %s213 = sor.u32 256, 104
    %214 = vbcast.lane.b32.xlu0 %v160, %s213
    %v215 = vpop.permute.xlu0 %214
    %s217 = sor.u32 256, 112
    %218 = vbcast.lane.b32.xlu0 %v160, %s217
    %v219 = vpop.permute.xlu0 %218
    %s221 = sor.u32 256, 120
    %222 = vbcast.lane.b32.xlu0 %v160, %s221
    %v223 = vpop.permute.xlu0 %222
    %v224 = vlaneseq
    %v225 = vshrl.u32 %v224, 7
    %v226 = vsub.s32 3, %v225
    %v227 = vrot.slane %v21, %v226
    %229 = vbcast.lane.b32.xlu0 %v227, 256
    %v230 = vpop.permute.xlu0 %229
    %s232 = sor.u32 256, 8
    %233 = vbcast.lane.b32.xlu0 %v227, %s232
    %v234 = vpop.permute.xlu0 %233
    %s236 = sor.u32 256, 16
    %237 = vbcast.lane.b32.xlu0 %v227, %s236
    %v238 = vpop.permute.xlu0 %237
    %s240 = sor.u32 256, 24
    %241 = vbcast.lane.b32.xlu0 %v227, %s240
    %v242 = vpop.permute.xlu0 %241
    %s244 = sor.u32 256, 32
    %245 = vbcast.lane.b32.xlu0 %v227, %s244
    %v246 = vpop.permute.xlu0 %245
    %s248 = sor.u32 256, 40
    %249 = vbcast.lane.b32.xlu0 %v227, %s248
    %v250 = vpop.permute.xlu0 %249
    %s252 = sor.u32 256, 48
    %253 = vbcast.lane.b32.xlu0 %v227, %s252
    %v254 = vpop.permute.xlu0 %253
    %s256 = sor.u32 256, 56
    %257 = vbcast.lane.b32.xlu0 %v227, %s256
    %v258 = vpop.permute.xlu0 %257
    %s260 = sor.u32 256, 64
    %261 = vbcast.lane.b32.xlu0 %v227, %s260
    %v262 = vpop.permute.xlu0 %261
    %s264 = sor.u32 256, 72
    %265 = vbcast.lane.b32.xlu0 %v227, %s264
    %v266 = vpop.permute.xlu0 %265
    %s268 = sor.u32 256, 80
    %269 = vbcast.lane.b32.xlu0 %v227, %s268
    %v270 = vpop.permute.xlu0 %269
    %s272 = sor.u32 256, 88
    %273 = vbcast.lane.b32.xlu0 %v227, %s272
    %v274 = vpop.permute.xlu0 %273
    %s276 = sor.u32 256, 96
    %277 = vbcast.lane.b32.xlu0 %v227, %s276
    %v278 = vpop.permute.xlu0 %277
    %s280 = sor.u32 256, 104
    %281 = vbcast.lane.b32.xlu0 %v227, %s280
    %v282 = vpop.permute.xlu0 %281
    %s284 = sor.u32 256, 112
    %285 = vbcast.lane.b32.xlu0 %v227, %s284
    %v286 = vpop.permute.xlu0 %285
    %s288 = sor.u32 256, 120
    %289 = vbcast.lane.b32.xlu0 %v227, %s288
    %v290 = vpop.permute.xlu0 %289
    %v291 = vlaneseq
    %v292 = vshrl.u32 %v291, 7
    %v293 = vsub.s32 4, %v292
    %v294 = vrot.slane %v21, %v293
    %296 = vbcast.lane.b32.xlu0 %v294, 256
    %v297 = vpop.permute.xlu0 %296
    %s299 = sor.u32 256, 8
    %300 = vbcast.lane.b32.xlu0 %v294, %s299
    %v301 = vpop.permute.xlu0 %300
    %s303 = sor.u32 256, 16
    %304 = vbcast.lane.b32.xlu0 %v294, %s303
    %v305 = vpop.permute.xlu0 %304
    %s307 = sor.u32 256, 24
    %308 = vbcast.lane.b32.xlu0 %v294, %s307
    %v309 = vpop.permute.xlu0 %308
    %s311 = sor.u32 256, 32
    %312 = vbcast.lane.b32.xlu0 %v294, %s311
    %v313 = vpop.permute.xlu0 %312
    %s315 = sor.u32 256, 40
    %316 = vbcast.lane.b32.xlu0 %v294, %s315
    %v317 = vpop.permute.xlu0 %316
    %s319 = sor.u32 256, 48
    %320 = vbcast.lane.b32.xlu0 %v294, %s319
    %v321 = vpop.permute.xlu0 %320
    %s323 = sor.u32 256, 56
    %324 = vbcast.lane.b32.xlu0 %v294, %s323
    %v325 = vpop.permute.xlu0 %324
    %s327 = sor.u32 256, 64
    %328 = vbcast.lane.b32.xlu0 %v294, %s327
    %v329 = vpop.permute.xlu0 %328
    %s331 = sor.u32 256, 72
    %332 = vbcast.lane.b32.xlu0 %v294, %s331
    %v333 = vpop.permute.xlu0 %332
    %s335 = sor.u32 256, 80
    %336 = vbcast.lane.b32.xlu0 %v294, %s335
    %v337 = vpop.permute.xlu0 %336
    %s339 = sor.u32 256, 88
    %340 = vbcast.lane.b32.xlu0 %v294, %s339
    %v341 = vpop.permute.xlu0 %340
    %s343 = sor.u32 256, 96
    %344 = vbcast.lane.b32.xlu0 %v294, %s343
    %v345 = vpop.permute.xlu0 %344
    %s347 = sor.u32 256, 104
    %348 = vbcast.lane.b32.xlu0 %v294, %s347
    %v349 = vpop.permute.xlu0 %348
    %s351 = sor.u32 256, 112
    %352 = vbcast.lane.b32.xlu0 %v294, %s351
    %v353 = vpop.permute.xlu0 %352
    %s355 = sor.u32 256, 120
    %356 = vbcast.lane.b32.xlu0 %v294, %s355
    %v357 = vpop.permute.xlu0 %356
    %v358 = vlaneseq
    %v359 = vshrl.u32 %v358, 7
    %v360 = vsub.s32 5, %v359
    %v361 = vrot.slane %v21, %v360
    %363 = vbcast.lane.b32.xlu0 %v361, 256
    %v364 = vpop.permute.xlu0 %363
    %s366 = sor.u32 256, 8
    %367 = vbcast.lane.b32.xlu0 %v361, %s366
    %v368 = vpop.permute.xlu0 %367
    %s370 = sor.u32 256, 16
    %371 = vbcast.lane.b32.xlu0 %v361, %s370
    %v372 = vpop.permute.xlu0 %371
    %s374 = sor.u32 256, 24
    %375 = vbcast.lane.b32.xlu0 %v361, %s374
    %v376 = vpop.permute.xlu0 %375
    %s378 = sor.u32 256, 32
    %379 = vbcast.lane.b32.xlu0 %v361, %s378
    %v380 = vpop.permute.xlu0 %379
    %s382 = sor.u32 256, 40
    %383 = vbcast.lane.b32.xlu0 %v361, %s382
    %v384 = vpop.permute.xlu0 %383
    %s386 = sor.u32 256, 48
    %387 = vbcast.lane.b32.xlu0 %v361, %s386
    %v388 = vpop.permute.xlu0 %387
    %s390 = sor.u32 256, 56
    %391 = vbcast.lane.b32.xlu0 %v361, %s390
    %v392 = vpop.permute.xlu0 %391
    %s394 = sor.u32 256, 64
    %395 = vbcast.lane.b32.xlu0 %v361, %s394
    %v396 = vpop.permute.xlu0 %395
    %s398 = sor.u32 256, 72
    %399 = vbcast.lane.b32.xlu0 %v361, %s398
    %v400 = vpop.permute.xlu0 %399
    %s402 = sor.u32 256, 80
    %403 = vbcast.lane.b32.xlu0 %v361, %s402
    %v404 = vpop.permute.xlu0 %403
    %s406 = sor.u32 256, 88
    %407 = vbcast.lane.b32.xlu0 %v361, %s406
    %v408 = vpop.permute.xlu0 %407
    %s410 = sor.u32 256, 96
    %411 = vbcast.lane.b32.xlu0 %v361, %s410
    %v412 = vpop.permute.xlu0 %411
    %s414 = sor.u32 256, 104
    %415 = vbcast.lane.b32.xlu0 %v361, %s414
    %v416 = vpop.permute.xlu0 %415
    %s418 = sor.u32 256, 112
    %419 = vbcast.lane.b32.xlu0 %v361, %s418
    %v420 = vpop.permute.xlu0 %419
    %s422 = sor.u32 256, 120
    %423 = vbcast.lane.b32.xlu0 %v361, %s422
    %v424 = vpop.permute.xlu0 %423
    %v425 = vlaneseq
    %v426 = vshrl.u32 %v425, 7
    %v427 = vsub.s32 6, %v426
    %v428 = vrot.slane %v21, %v427
    %430 = vbcast.lane.b32.xlu0 %v428, 256
    %v431 = vpop.permute.xlu0 %430
    %s433 = sor.u32 256, 8
    %434 = vbcast.lane.b32.xlu0 %v428, %s433
    %v435 = vpop.permute.xlu0 %434
    %s437 = sor.u32 256, 16
    %438 = vbcast.lane.b32.xlu0 %v428, %s437
    %v439 = vpop.permute.xlu0 %438
    %s441 = sor.u32 256, 24
    %442 = vbcast.lane.b32.xlu0 %v428, %s441
    %v443 = vpop.permute.xlu0 %442
    %s445 = sor.u32 256, 32
    %446 = vbcast.lane.b32.xlu0 %v428, %s445
    %v447 = vpop.permute.xlu0 %446
    %s449 = sor.u32 256, 40
    %450 = vbcast.lane.b32.xlu0 %v428, %s449
    %v451 = vpop.permute.xlu0 %450
    %s453 = sor.u32 256, 48
    %454 = vbcast.lane.b32.xlu0 %v428, %s453
    %v455 = vpop.permute.xlu0 %454
    %s457 = sor.u32 256, 56
    %458 = vbcast.lane.b32.xlu0 %v428, %s457
    %v459 = vpop.permute.xlu0 %458
    %s461 = sor.u32 256, 64
    %462 = vbcast.lane.b32.xlu0 %v428, %s461
    %v463 = vpop.permute.xlu0 %462
    %s465 = sor.u32 256, 72
    %466 = vbcast.lane.b32.xlu0 %v428, %s465
    %v467 = vpop.permute.xlu0 %466
    %s469 = sor.u32 256, 80
    %470 = vbcast.lane.b32.xlu0 %v428, %s469
    %v471 = vpop.permute.xlu0 %470
    %s473 = sor.u32 256, 88
    %474 = vbcast.lane.b32.xlu0 %v428, %s473
    %v475 = vpop.permute.xlu0 %474
    %s477 = sor.u32 256, 96
    %478 = vbcast.lane.b32.xlu0 %v428, %s477
    %v479 = vpop.permute.xlu0 %478
    %s481 = sor.u32 256, 104
    %482 = vbcast.lane.b32.xlu0 %v428, %s481
    %v483 = vpop.permute.xlu0 %482
    %s485 = sor.u32 256, 112
    %486 = vbcast.lane.b32.xlu0 %v428, %s485
    %v487 = vpop.permute.xlu0 %486
    %s489 = sor.u32 256, 120
    %490 = vbcast.lane.b32.xlu0 %v428, %s489
    %v491 = vpop.permute.xlu0 %490
    %v492 = vlaneseq
    %v493 = vshrl.u32 %v492, 7
    %v494 = vsub.s32 7, %v493
    %v495 = vrot.slane %v21, %v494
    %497 = vbcast.lane.b32.xlu0 %v495, 256
    %v498 = vpop.permute.xlu0 %497
    %s500 = sor.u32 256, 8
    %501 = vbcast.lane.b32.xlu0 %v495, %s500
    %v502 = vpop.permute.xlu0 %501
    %s504 = sor.u32 256, 16
    %505 = vbcast.lane.b32.xlu0 %v495, %s504
    %v506 = vpop.permute.xlu0 %505
    %s508 = sor.u32 256, 24
    %509 = vbcast.lane.b32.xlu0 %v495, %s508
    %v510 = vpop.permute.xlu0 %509
    %s512 = sor.u32 256, 32
    %513 = vbcast.lane.b32.xlu0 %v495, %s512
    %v514 = vpop.permute.xlu0 %513
    %s516 = sor.u32 256, 40
    %517 = vbcast.lane.b32.xlu0 %v495, %s516
    %v518 = vpop.permute.xlu0 %517
    %s520 = sor.u32 256, 48
    %521 = vbcast.lane.b32.xlu0 %v495, %s520
    %v522 = vpop.permute.xlu0 %521
    %s524 = sor.u32 256, 56
    %525 = vbcast.lane.b32.xlu0 %v495, %s524
    %v526 = vpop.permute.xlu0 %525
    %s528 = sor.u32 256, 64
    %529 = vbcast.lane.b32.xlu0 %v495, %s528
    %v530 = vpop.permute.xlu0 %529
    %s532 = sor.u32 256, 72
    %533 = vbcast.lane.b32.xlu0 %v495, %s532
    %v534 = vpop.permute.xlu0 %533
    %s536 = sor.u32 256, 80
    %537 = vbcast.lane.b32.xlu0 %v495, %s536
    %v538 = vpop.permute.xlu0 %537
    %s540 = sor.u32 256, 88
    %541 = vbcast.lane.b32.xlu0 %v495, %s540
    %v542 = vpop.permute.xlu0 %541
    %s544 = sor.u32 256, 96
    %545 = vbcast.lane.b32.xlu0 %v495, %s544
    %v546 = vpop.permute.xlu0 %545
    %s548 = sor.u32 256, 104
    %549 = vbcast.lane.b32.xlu0 %v495, %s548
    %v550 = vpop.permute.xlu0 %549
    %s552 = sor.u32 256, 112
    %553 = vbcast.lane.b32.xlu0 %v495, %s552
    %v554 = vpop.permute.xlu0 %553
    %s556 = sor.u32 256, 120
    %557 = vbcast.lane.b32.xlu0 %v495, %s556
    %v558 = vpop.permute.xlu0 %557
    %v559 = vlaneseq
    %v560 = vshrl.u32 %v559, 7
    %v561 = vsub.s32 0, %v560
    %v562 = vrot.slane %v22, %v561
    %564 = vbcast.lane.b32.xlu0 %v562, 256
    %v565 = vpop.permute.xlu0 %564
    %s567 = sor.u32 256, 8
    %568 = vbcast.lane.b32.xlu0 %v562, %s567
    %v569 = vpop.permute.xlu0 %568
    %s571 = sor.u32 256, 16
    %572 = vbcast.lane.b32.xlu0 %v562, %s571
    %v573 = vpop.permute.xlu0 %572
    %s575 = sor.u32 256, 24
    %576 = vbcast.lane.b32.xlu0 %v562, %s575
    %v577 = vpop.permute.xlu0 %576
    %s579 = sor.u32 256, 32
    %580 = vbcast.lane.b32.xlu0 %v562, %s579
    %v581 = vpop.permute.xlu0 %580
    %s583 = sor.u32 256, 40
    %584 = vbcast.lane.b32.xlu0 %v562, %s583
    %v585 = vpop.permute.xlu0 %584
    %s587 = sor.u32 256, 48
    %588 = vbcast.lane.b32.xlu0 %v562, %s587
    %v589 = vpop.permute.xlu0 %588
    %s591 = sor.u32 256, 56
    %592 = vbcast.lane.b32.xlu0 %v562, %s591
    %v593 = vpop.permute.xlu0 %592
    %s595 = sor.u32 256, 64
    %596 = vbcast.lane.b32.xlu0 %v562, %s595
    %v597 = vpop.permute.xlu0 %596
    %s599 = sor.u32 256, 72
    %600 = vbcast.lane.b32.xlu0 %v562, %s599
    %v601 = vpop.permute.xlu0 %600
    %s603 = sor.u32 256, 80
    %604 = vbcast.lane.b32.xlu0 %v562, %s603
    %v605 = vpop.permute.xlu0 %604
    %s607 = sor.u32 256, 88
    %608 = vbcast.lane.b32.xlu0 %v562, %s607
    %v609 = vpop.permute.xlu0 %608
    %s611 = sor.u32 256, 96
    %612 = vbcast.lane.b32.xlu0 %v562, %s611
    %v613 = vpop.permute.xlu0 %612
    %s615 = sor.u32 256, 104
    %616 = vbcast.lane.b32.xlu0 %v562, %s615
    %v617 = vpop.permute.xlu0 %616
    %s619 = sor.u32 256, 112
    %620 = vbcast.lane.b32.xlu0 %v562, %s619
    %v621 = vpop.permute.xlu0 %620
    %s623 = sor.u32 256, 120
    %624 = vbcast.lane.b32.xlu0 %v562, %s623
    %v625 = vpop.permute.xlu0 %624
    %v626 = vlaneseq
    %v627 = vshrl.u32 %v626, 7
    %v628 = vsub.s32 1, %v627
    %v629 = vrot.slane %v22, %v628
    %631 = vbcast.lane.b32.xlu0 %v629, 256
    %v632 = vpop.permute.xlu0 %631
    %s634 = sor.u32 256, 8
    %635 = vbcast.lane.b32.xlu0 %v629, %s634
    %v636 = vpop.permute.xlu0 %635
    %s638 = sor.u32 256, 16
    %639 = vbcast.lane.b32.xlu0 %v629, %s638
    %v640 = vpop.permute.xlu0 %639
    %s642 = sor.u32 256, 24
    %643 = vbcast.lane.b32.xlu0 %v629, %s642
    %v644 = vpop.permute.xlu0 %643
    %s646 = sor.u32 256, 32
    %647 = vbcast.lane.b32.xlu0 %v629, %s646
    %v648 = vpop.permute.xlu0 %647
    %s650 = sor.u32 256, 40
    %651 = vbcast.lane.b32.xlu0 %v629, %s650
    %v652 = vpop.permute.xlu0 %651
    %s654 = sor.u32 256, 48
    %655 = vbcast.lane.b32.xlu0 %v629, %s654
    %v656 = vpop.permute.xlu0 %655
    %s658 = sor.u32 256, 56
    %659 = vbcast.lane.b32.xlu0 %v629, %s658
    %v660 = vpop.permute.xlu0 %659
    %s662 = sor.u32 256, 64
    %663 = vbcast.lane.b32.xlu0 %v629, %s662
    %v664 = vpop.permute.xlu0 %663
    %s666 = sor.u32 256, 72
    %667 = vbcast.lane.b32.xlu0 %v629, %s666
    %v668 = vpop.permute.xlu0 %667
    %s670 = sor.u32 256, 80
    %671 = vbcast.lane.b32.xlu0 %v629, %s670
    %v672 = vpop.permute.xlu0 %671
    %s674 = sor.u32 256, 88
    %675 = vbcast.lane.b32.xlu0 %v629, %s674
    %v676 = vpop.permute.xlu0 %675
    %s678 = sor.u32 256, 96
    %679 = vbcast.lane.b32.xlu0 %v629, %s678
    %v680 = vpop.permute.xlu0 %679
    %s682 = sor.u32 256, 104
    %683 = vbcast.lane.b32.xlu0 %v629, %s682
    %v684 = vpop.permute.xlu0 %683
    %s686 = sor.u32 256, 112
    %687 = vbcast.lane.b32.xlu0 %v629, %s686
    %v688 = vpop.permute.xlu0 %687
    %s690 = sor.u32 256, 120
    %691 = vbcast.lane.b32.xlu0 %v629, %s690
    %v692 = vpop.permute.xlu0 %691
    %v693 = vlaneseq
    %v694 = vshrl.u32 %v693, 7
    %v695 = vsub.s32 2, %v694
    %v696 = vrot.slane %v22, %v695
    %698 = vbcast.lane.b32.xlu0 %v696, 256
    %v699 = vpop.permute.xlu0 %698
    %s701 = sor.u32 256, 8
    %702 = vbcast.lane.b32.xlu0 %v696, %s701
    %v703 = vpop.permute.xlu0 %702
    %s705 = sor.u32 256, 16
    %706 = vbcast.lane.b32.xlu0 %v696, %s705
    %v707 = vpop.permute.xlu0 %706
    %s709 = sor.u32 256, 24
    %710 = vbcast.lane.b32.xlu0 %v696, %s709
    %v711 = vpop.permute.xlu0 %710
    %s713 = sor.u32 256, 32
    %714 = vbcast.lane.b32.xlu0 %v696, %s713
    %v715 = vpop.permute.xlu0 %714
    %s717 = sor.u32 256, 40
    %718 = vbcast.lane.b32.xlu0 %v696, %s717
    %v719 = vpop.permute.xlu0 %718
    %s721 = sor.u32 256, 48
    %722 = vbcast.lane.b32.xlu0 %v696, %s721
    %v723 = vpop.permute.xlu0 %722
    %s725 = sor.u32 256, 56
    %726 = vbcast.lane.b32.xlu0 %v696, %s725
    %v727 = vpop.permute.xlu0 %726
    %s729 = sor.u32 256, 64
    %730 = vbcast.lane.b32.xlu0 %v696, %s729
    %v731 = vpop.permute.xlu0 %730
    %s733 = sor.u32 256, 72
    %734 = vbcast.lane.b32.xlu0 %v696, %s733
    %v735 = vpop.permute.xlu0 %734
    %s737 = sor.u32 256, 80
    %738 = vbcast.lane.b32.xlu0 %v696, %s737
    %v739 = vpop.permute.xlu0 %738
    %s741 = sor.u32 256, 88
    %742 = vbcast.lane.b32.xlu0 %v696, %s741
    %v743 = vpop.permute.xlu0 %742
    %s745 = sor.u32 256, 96
    %746 = vbcast.lane.b32.xlu0 %v696, %s745
    %v747 = vpop.permute.xlu0 %746
    %s749 = sor.u32 256, 104
    %750 = vbcast.lane.b32.xlu0 %v696, %s749
    %v751 = vpop.permute.xlu0 %750
    %s753 = sor.u32 256, 112
    %754 = vbcast.lane.b32.xlu0 %v696, %s753
    %v755 = vpop.permute.xlu0 %754
    %s757 = sor.u32 256, 120
    %758 = vbcast.lane.b32.xlu0 %v696, %s757
    %v759 = vpop.permute.xlu0 %758
    %v760 = vlaneseq
    %v761 = vshrl.u32 %v760, 7
    %v762 = vsub.s32 3, %v761
    %v763 = vrot.slane %v22, %v762
    %765 = vbcast.lane.b32.xlu0 %v763, 256
    %v766 = vpop.permute.xlu0 %765
    %s768 = sor.u32 256, 8
    %769 = vbcast.lane.b32.xlu0 %v763, %s768
    %v770 = vpop.permute.xlu0 %769
    %s772 = sor.u32 256, 16
    %773 = vbcast.lane.b32.xlu0 %v763, %s772
    %v774 = vpop.permute.xlu0 %773
    %s776 = sor.u32 256, 24
    %777 = vbcast.lane.b32.xlu0 %v763, %s776
    %v778 = vpop.permute.xlu0 %777
    %s780 = sor.u32 256, 32
    %781 = vbcast.lane.b32.xlu0 %v763, %s780
    %v782 = vpop.permute.xlu0 %781
    %s784 = sor.u32 256, 40
    %785 = vbcast.lane.b32.xlu0 %v763, %s784
    %v786 = vpop.permute.xlu0 %785
    %s788 = sor.u32 256, 48
    %789 = vbcast.lane.b32.xlu0 %v763, %s788
    %v790 = vpop.permute.xlu0 %789
    %s792 = sor.u32 256, 56
    %793 = vbcast.lane.b32.xlu0 %v763, %s792
    %v794 = vpop.permute.xlu0 %793
    %s796 = sor.u32 256, 64
    %797 = vbcast.lane.b32.xlu0 %v763, %s796
    %v798 = vpop.permute.xlu0 %797
    %s800 = sor.u32 256, 72
    %801 = vbcast.lane.b32.xlu0 %v763, %s800
    %v802 = vpop.permute.xlu0 %801
    %s804 = sor.u32 256, 80
    %805 = vbcast.lane.b32.xlu0 %v763, %s804
    %v806 = vpop.permute.xlu0 %805
    %s808 = sor.u32 256, 88
    %809 = vbcast.lane.b32.xlu0 %v763, %s808
    %v810 = vpop.permute.xlu0 %809
    %s812 = sor.u32 256, 96
    %813 = vbcast.lane.b32.xlu0 %v763, %s812
    %v814 = vpop.permute.xlu0 %813
    %s816 = sor.u32 256, 104
    %817 = vbcast.lane.b32.xlu0 %v763, %s816
    %v818 = vpop.permute.xlu0 %817
    %s820 = sor.u32 256, 112
    %821 = vbcast.lane.b32.xlu0 %v763, %s820
    %v822 = vpop.permute.xlu0 %821
    %s824 = sor.u32 256, 120
    %825 = vbcast.lane.b32.xlu0 %v763, %s824
    %v826 = vpop.permute.xlu0 %825
    %v827 = vlaneseq
    %v828 = vshrl.u32 %v827, 7
    %v829 = vsub.s32 4, %v828
    %v830 = vrot.slane %v22, %v829
    %832 = vbcast.lane.b32.xlu0 %v830, 256
    %v833 = vpop.permute.xlu0 %832
    %s835 = sor.u32 256, 8
    %836 = vbcast.lane.b32.xlu0 %v830, %s835
    %v837 = vpop.permute.xlu0 %836
    %s839 = sor.u32 256, 16
    %840 = vbcast.lane.b32.xlu0 %v830, %s839
    %v841 = vpop.permute.xlu0 %840
    %s843 = sor.u32 256, 24
    %844 = vbcast.lane.b32.xlu0 %v830, %s843
    %v845 = vpop.permute.xlu0 %844
    %s847 = sor.u32 256, 32
    %848 = vbcast.lane.b32.xlu0 %v830, %s847
    %v849 = vpop.permute.xlu0 %848
    %s851 = sor.u32 256, 40
    %852 = vbcast.lane.b32.xlu0 %v830, %s851
    %v853 = vpop.permute.xlu0 %852
    %s855 = sor.u32 256, 48
    %856 = vbcast.lane.b32.xlu0 %v830, %s855
    %v857 = vpop.permute.xlu0 %856
    %s859 = sor.u32 256, 56
    %860 = vbcast.lane.b32.xlu0 %v830, %s859
    %v861 = vpop.permute.xlu0 %860
    %s863 = sor.u32 256, 64
    %864 = vbcast.lane.b32.xlu0 %v830, %s863
    %v865 = vpop.permute.xlu0 %864
    %s867 = sor.u32 256, 72
    %868 = vbcast.lane.b32.xlu0 %v830, %s867
    %v869 = vpop.permute.xlu0 %868
    %s871 = sor.u32 256, 80
    %872 = vbcast.lane.b32.xlu0 %v830, %s871
    %v873 = vpop.permute.xlu0 %872
    %s875 = sor.u32 256, 88
    %876 = vbcast.lane.b32.xlu0 %v830, %s875
    %v877 = vpop.permute.xlu0 %876
    %s879 = sor.u32 256, 96
    %880 = vbcast.lane.b32.xlu0 %v830, %s879
    %v881 = vpop.permute.xlu0 %880
    %s883 = sor.u32 256, 104
    %884 = vbcast.lane.b32.xlu0 %v830, %s883
    %v885 = vpop.permute.xlu0 %884
    %s887 = sor.u32 256, 112
    %888 = vbcast.lane.b32.xlu0 %v830, %s887
    %v889 = vpop.permute.xlu0 %888
    %s891 = sor.u32 256, 120
    %892 = vbcast.lane.b32.xlu0 %v830, %s891
    %v893 = vpop.permute.xlu0 %892
    %v894 = vlaneseq
    %v895 = vshrl.u32 %v894, 7
    %v896 = vsub.s32 5, %v895
    %v897 = vrot.slane %v22, %v896
    %899 = vbcast.lane.b32.xlu0 %v897, 256
    %v900 = vpop.permute.xlu0 %899
    %s902 = sor.u32 256, 8
    %903 = vbcast.lane.b32.xlu0 %v897, %s902
    %v904 = vpop.permute.xlu0 %903
    %s906 = sor.u32 256, 16
    %907 = vbcast.lane.b32.xlu0 %v897, %s906
    %v908 = vpop.permute.xlu0 %907
    %s910 = sor.u32 256, 24
    %911 = vbcast.lane.b32.xlu0 %v897, %s910
    %v912 = vpop.permute.xlu0 %911
    %s914 = sor.u32 256, 32
    %915 = vbcast.lane.b32.xlu0 %v897, %s914
    %v916 = vpop.permute.xlu0 %915
    %s918 = sor.u32 256, 40
    %919 = vbcast.lane.b32.xlu0 %v897, %s918
    %v920 = vpop.permute.xlu0 %919
    %s922 = sor.u32 256, 48
    %923 = vbcast.lane.b32.xlu0 %v897, %s922
    %v924 = vpop.permute.xlu0 %923
    %s926 = sor.u32 256, 56
    %927 = vbcast.lane.b32.xlu0 %v897, %s926
    %v928 = vpop.permute.xlu0 %927
    %s930 = sor.u32 256, 64
    %931 = vbcast.lane.b32.xlu0 %v897, %s930
    %v932 = vpop.permute.xlu0 %931
    %s934 = sor.u32 256, 72
    %935 = vbcast.lane.b32.xlu0 %v897, %s934
    %v936 = vpop.permute.xlu0 %935
    %s938 = sor.u32 256, 80
    %939 = vbcast.lane.b32.xlu0 %v897, %s938
    %v940 = vpop.permute.xlu0 %939
    %s942 = sor.u32 256, 88
    %943 = vbcast.lane.b32.xlu0 %v897, %s942
    %v944 = vpop.permute.xlu0 %943
    %s946 = sor.u32 256, 96
    %947 = vbcast.lane.b32.xlu0 %v897, %s946
    %v948 = vpop.permute.xlu0 %947
    %s950 = sor.u32 256, 104
    %951 = vbcast.lane.b32.xlu0 %v897, %s950
    %v952 = vpop.permute.xlu0 %951
    %s954 = sor.u32 256, 112
    %955 = vbcast.lane.b32.xlu0 %v897, %s954
    %v956 = vpop.permute.xlu0 %955
    %s958 = sor.u32 256, 120
    %959 = vbcast.lane.b32.xlu0 %v897, %s958
    %v960 = vpop.permute.xlu0 %959
    %v961 = vlaneseq
    %v962 = vshrl.u32 %v961, 7
    %v963 = vsub.s32 6, %v962
    %v964 = vrot.slane %v22, %v963
    %966 = vbcast.lane.b32.xlu0 %v964, 256
    %v967 = vpop.permute.xlu0 %966
    %s969 = sor.u32 256, 8
    %970 = vbcast.lane.b32.xlu0 %v964, %s969
    %v971 = vpop.permute.xlu0 %970
    %s973 = sor.u32 256, 16
    %974 = vbcast.lane.b32.xlu0 %v964, %s973
    %v975 = vpop.permute.xlu0 %974
    %s977 = sor.u32 256, 24
    %978 = vbcast.lane.b32.xlu0 %v964, %s977
    %v979 = vpop.permute.xlu0 %978
    %s981 = sor.u32 256, 32
    %982 = vbcast.lane.b32.xlu0 %v964, %s981
    %v983 = vpop.permute.xlu0 %982
    %s985 = sor.u32 256, 40
    %986 = vbcast.lane.b32.xlu0 %v964, %s985
    %v987 = vpop.permute.xlu0 %986
    %s989 = sor.u32 256, 48
    %990 = vbcast.lane.b32.xlu0 %v964, %s989
    %v991 = vpop.permute.xlu0 %990
    %s993 = sor.u32 256, 56
    %994 = vbcast.lane.b32.xlu0 %v964, %s993
    %v995 = vpop.permute.xlu0 %994
    %s997 = sor.u32 256, 64
    %998 = vbcast.lane.b32.xlu0 %v964, %s997
    %v999 = vpop.permute.xlu0 %998
    %s1001 = sor.u32 256, 72
    %1002 = vbcast.lane.b32.xlu0 %v964, %s1001
    %v1003 = vpop.permute.xlu0 %1002
    %s1005 = sor.u32 256, 80
    %1006 = vbcast.lane.b32.xlu0 %v964, %s1005
    %v1007 = vpop.permute.xlu0 %1006
    %s1009 = sor.u32 256, 88
    %1010 = vbcast.lane.b32.xlu0 %v964, %s1009
    %v1011 = vpop.permute.xlu0 %1010
    %s1013 = sor.u32 256, 96
    %1014 = vbcast.lane.b32.xlu0 %v964, %s1013
    %v1015 = vpop.permute.xlu0 %1014
    %s1017 = sor.u32 256, 104
    %1018 = vbcast.lane.b32.xlu0 %v964, %s1017
    %v1019 = vpop.permute.xlu0 %1018
    %s1021 = sor.u32 256, 112
    %1022 = vbcast.lane.b32.xlu0 %v964, %s1021
    %v1023 = vpop.permute.xlu0 %1022
    %s1025 = sor.u32 256, 120
    %1026 = vbcast.lane.b32.xlu0 %v964, %s1025
    %v1027 = vpop.permute.xlu0 %1026
    %v1028 = vlaneseq
    %v1029 = vshrl.u32 %v1028, 7
    %v1030 = vsub.s32 7, %v1029
    %v1031 = vrot.slane %v22, %v1030
    %1033 = vbcast.lane.b32.xlu0 %v1031, 256
    %v1034 = vpop.permute.xlu0 %1033
    %s1036 = sor.u32 256, 8
    %1037 = vbcast.lane.b32.xlu0 %v1031, %s1036
    %v1038 = vpop.permute.xlu0 %1037
    %s1040 = sor.u32 256, 16
    %1041 = vbcast.lane.b32.xlu0 %v1031, %s1040
    %v1042 = vpop.permute.xlu0 %1041
    %s1044 = sor.u32 256, 24
    %1045 = vbcast.lane.b32.xlu0 %v1031, %s1044
    %v1046 = vpop.permute.xlu0 %1045
    %s1048 = sor.u32 256, 32
    %1049 = vbcast.lane.b32.xlu0 %v1031, %s1048
    %v1050 = vpop.permute.xlu0 %1049
    %s1052 = sor.u32 256, 40
    %1053 = vbcast.lane.b32.xlu0 %v1031, %s1052
    %v1054 = vpop.permute.xlu0 %1053
    %s1056 = sor.u32 256, 48
    %1057 = vbcast.lane.b32.xlu0 %v1031, %s1056
    %v1058 = vpop.permute.xlu0 %1057
    %s1060 = sor.u32 256, 56
    %1061 = vbcast.lane.b32.xlu0 %v1031, %s1060
    %v1062 = vpop.permute.xlu0 %1061
    %s1064 = sor.u32 256, 64
    %1065 = vbcast.lane.b32.xlu0 %v1031, %s1064
    %v1066 = vpop.permute.xlu0 %1065
    %s1068 = sor.u32 256, 72
    %1069 = vbcast.lane.b32.xlu0 %v1031, %s1068
    %v1070 = vpop.permute.xlu0 %1069
    %s1072 = sor.u32 256, 80
    %1073 = vbcast.lane.b32.xlu0 %v1031, %s1072
    %v1074 = vpop.permute.xlu0 %1073
    %s1076 = sor.u32 256, 88
    %1077 = vbcast.lane.b32.xlu0 %v1031, %s1076
    %v1078 = vpop.permute.xlu0 %1077
    %s1080 = sor.u32 256, 96
    %1081 = vbcast.lane.b32.xlu0 %v1031, %s1080
    %v1082 = vpop.permute.xlu0 %1081
    %s1084 = sor.u32 256, 104
    %1085 = vbcast.lane.b32.xlu0 %v1031, %s1084
    %v1086 = vpop.permute.xlu0 %1085
    %s1088 = sor.u32 256, 112
    %1089 = vbcast.lane.b32.xlu0 %v1031, %s1088
    %v1090 = vpop.permute.xlu0 %1089
    %s1092 = sor.u32 256, 120
    %1093 = vbcast.lane.b32.xlu0 %v1031, %s1092
    %v1094 = vpop.permute.xlu0 %1093
    %vm1095 = vcmask 7168
    %v1096 = vsel %vm1095, %v29, %v565
    %v1097 = vsel %vm1095, %v33, %v569
    %v1098 = vsel %vm1095, %v37, %v573
    %v1099 = vsel %vm1095, %v41, %v577
    %v1100 = vsel %vm1095, %v45, %v581
    %v1101 = vsel %vm1095, %v49, %v585
    %v1102 = vsel %vm1095, %v53, %v589
    %v1103 = vsel %vm1095, %v57, %v593
    %v1104 = vsel %vm1095, %v61, %v597
    %v1105 = vsel %vm1095, %v65, %v601
    %v1106 = vsel %vm1095, %v69, %v605
    %v1107 = vsel %vm1095, %v73, %v609
    %v1108 = vsel %vm1095, %v77, %v613
    %v1109 = vsel %vm1095, %v81, %v617
    %v1110 = vsel %vm1095, %v85, %v621
    %v1111 = vsel %vm1095, %v89, %v625
    %v1112 = vsel %vm1095, %v96, %v632
    %v1113 = vsel %vm1095, %v100, %v636
    %v1114 = vsel %vm1095, %v104, %v640
    %v1115 = vsel %vm1095, %v108, %v644
    %v1116 = vsel %vm1095, %v112, %v648
    %v1117 = vsel %vm1095, %v116, %v652
    %v1118 = vsel %vm1095, %v120, %v656
    %v1119 = vsel %vm1095, %v124, %v660
    %v1120 = vsel %vm1095, %v128, %v664
    %v1121 = vsel %vm1095, %v132, %v668
    %v1122 = vsel %vm1095, %v136, %v672
    %v1123 = vsel %vm1095, %v140, %v676
    %v1124 = vsel %vm1095, %v144, %v680
    %v1125 = vsel %vm1095, %v148, %v684
    %v1126 = vsel %vm1095, %v152, %v688
    %v1127 = vsel %vm1095, %v156, %v692
    %v1128 = vsel %vm1095, %v163, %v699
    %v1129 = vsel %vm1095, %v167, %v703
    %v1130 = vsel %vm1095, %v171, %v707
    %v1131 = vsel %vm1095, %v175, %v711
    %v1132 = vsel %vm1095, %v179, %v715
    %v1133 = vsel %vm1095, %v183, %v719
    %v1134 = vsel %vm1095, %v187, %v723
    %v1135 = vsel %vm1095, %v191, %v727
    %v1136 = vsel %vm1095, %v195, %v731
    %v1137 = vsel %vm1095, %v199, %v735
    %v1138 = vsel %vm1095, %v203, %v739
    %v1139 = vsel %vm1095, %v207, %v743
    %v1140 = vsel %vm1095, %v211, %v747
    %v1141 = vsel %vm1095, %v215, %v751
    %v1142 = vsel %vm1095, %v219, %v755
    %v1143 = vsel %vm1095, %v223, %v759
    %v1144 = vsel %vm1095, %v230, %v766
    %v1145 = vsel %vm1095, %v234, %v770
    %v1146 = vsel %vm1095, %v238, %v774
    %v1147 = vsel %vm1095, %v242, %v778
    %v1148 = vsel %vm1095, %v246, %v782
    %v1149 = vsel %vm1095, %v250, %v786
    %v1150 = vsel %vm1095, %v254, %v790
    %v1151 = vsel %vm1095, %v258, %v794
    %v1152 = vsel %vm1095, %v262, %v798
    %v1153 = vsel %vm1095, %v266, %v802
    %v1154 = vsel %vm1095, %v270, %v806
    %v1155 = vsel %vm1095, %v274, %v810
    %v1156 = vsel %vm1095, %v278, %v814
    %v1157 = vsel %vm1095, %v282, %v818
    %v1158 = vsel %vm1095, %v286, %v822
    %v1159 = vsel %vm1095, %v290, %v826
    %v1160 = vsel %vm1095, %v297, %v833
    %v1161 = vsel %vm1095, %v301, %v837
    %v1162 = vsel %vm1095, %v305, %v841
    %v1163 = vsel %vm1095, %v309, %v845
    %v1164 = vsel %vm1095, %v313, %v849
    %v1165 = vsel %vm1095, %v317, %v853
    %v1166 = vsel %vm1095, %v321, %v857
    %v1167 = vsel %vm1095, %v325, %v861
    %v1168 = vsel %vm1095, %v329, %v865
    %v1169 = vsel %vm1095, %v333, %v869
    %v1170 = vsel %vm1095, %v337, %v873
    %v1171 = vsel %vm1095, %v341, %v877
    %v1172 = vsel %vm1095, %v345, %v881
    %v1173 = vsel %vm1095, %v349, %v885
    %v1174 = vsel %vm1095, %v353, %v889
    %v1175 = vsel %vm1095, %v357, %v893
    %v1176 = vsel %vm1095, %v364, %v900
    %v1177 = vsel %vm1095, %v368, %v904
    %v1178 = vsel %vm1095, %v372, %v908
    %v1179 = vsel %vm1095, %v376, %v912
    %v1180 = vsel %vm1095, %v380, %v916
    %v1181 = vsel %vm1095, %v384, %v920
    %v1182 = vsel %vm1095, %v388, %v924
    %v1183 = vsel %vm1095, %v392, %v928
    %v1184 = vsel %vm1095, %v396, %v932
    %v1185 = vsel %vm1095, %v400, %v936
    %v1186 = vsel %vm1095, %v404, %v940
    %v1187 = vsel %vm1095, %v408, %v944
    %v1188 = vsel %vm1095, %v412, %v948
    %v1189 = vsel %vm1095, %v416, %v952
    %v1190 = vsel %vm1095, %v420, %v956
    %v1191 = vsel %vm1095, %v424, %v960
    %v1192 = vsel %vm1095, %v431, %v967
    %v1193 = vsel %vm1095, %v435, %v971
    %v1194 = vsel %vm1095, %v439, %v975
    %v1195 = vsel %vm1095, %v443, %v979
    %v1196 = vsel %vm1095, %v447, %v983
    %v1197 = vsel %vm1095, %v451, %v987
    %v1198 = vsel %vm1095, %v455, %v991
    %v1199 = vsel %vm1095, %v459, %v995
    %v1200 = vsel %vm1095, %v463, %v999
    %v1201 = vsel %vm1095, %v467, %v1003
    %v1202 = vsel %vm1095, %v471, %v1007
    %v1203 = vsel %vm1095, %v475, %v1011
    %v1204 = vsel %vm1095, %v479, %v1015
    %v1205 = vsel %vm1095, %v483, %v1019
    %v1206 = vsel %vm1095, %v487, %v1023
    %v1207 = vsel %vm1095, %v491, %v1027
    %v1208 = vsel %vm1095, %v498, %v1034
    %v1209 = vsel %vm1095, %v502, %v1038
    %v1210 = vsel %vm1095, %v506, %v1042
    %v1211 = vsel %vm1095, %v510, %v1046
    %v1212 = vsel %vm1095, %v514, %v1050
    %v1213 = vsel %vm1095, %v518, %v1054
    %v1214 = vsel %vm1095, %v522, %v1058
    %v1215 = vsel %vm1095, %v526, %v1062
    %v1216 = vsel %vm1095, %v530, %v1066
    %v1217 = vsel %vm1095, %v534, %v1070
    %v1218 = vsel %vm1095, %v538, %v1074
    %v1219 = vsel %vm1095, %v542, %v1078
    %v1220 = vsel %vm1095, %v546, %v1082
    %v1221 = vsel %vm1095, %v550, %v1086
    %v1222 = vsel %vm1095, %v554, %v1090
    %v1223 = vsel %vm1095, %v558, %v1094
    %v1224 = vcombine.low %v1096, %v1128
    %v1225 = vcombine.high %v1096, %v1128
    %v1227 = vunpack.c.l.s4 1983009808
    %v1228 = vunpack.c.0.s8 %v1227
    %v1229 = vlaneseq
    %v1230 = vshrl.u32 %v1229, 7
    %v1231 = vsub.s32 %v1228, %v1230
    %v1232 = vrot.slane %v1224, %v1231
    %v1234 = vunpack.c.l.s4 1983009808
    %v1235 = vunpack.c.0.s8 %v1234
    %v1236 = vlaneseq
    %v1237 = vshrl.u32 %v1236, 7
    %v1238 = vsub.s32 %v1235, %v1237
    %v1239 = vrot.slane %v1225, %v1238
    %v1240 = vcombine.low %v1112, %v1144
    %v1241 = vcombine.high %v1112, %v1144
    %v1243 = vunpack.c.l.s4 1983009808
    %v1244 = vunpack.c.0.s8 %v1243
    %v1245 = vlaneseq
    %v1246 = vshrl.u32 %v1245, 7
    %v1247 = vsub.s32 %v1244, %v1246
    %v1248 = vrot.slane %v1240, %v1247
    %v1250 = vunpack.c.l.s4 1983009808
    %v1251 = vunpack.c.0.s8 %v1250
    %v1252 = vlaneseq
    %v1253 = vshrl.u32 %v1252, 7
    %v1254 = vsub.s32 %v1251, %v1253
    %v1255 = vrot.slane %v1241, %v1254
    %v1256 = vcombine.low %v1160, %v1192
    %v1257 = vcombine.high %v1160, %v1192
    %v1259 = vunpack.c.l.s4 1983009808
    %v1260 = vunpack.c.0.s8 %v1259
    %v1261 = vlaneseq
    %v1262 = vshrl.u32 %v1261, 7
    %v1263 = vsub.s32 %v1260, %v1262
    %v1264 = vrot.slane %v1256, %v1263
    %v1266 = vunpack.c.l.s4 1983009808
    %v1267 = vunpack.c.0.s8 %v1266
    %v1268 = vlaneseq
    %v1269 = vshrl.u32 %v1268, 7
    %v1270 = vsub.s32 %v1267, %v1269
    %v1271 = vrot.slane %v1257, %v1270
    %v1272 = vcombine.low %v1176, %v1208
    %v1273 = vcombine.high %v1176, %v1208
    %v1275 = vunpack.c.l.s4 1983009808
    %v1276 = vunpack.c.0.s8 %v1275
    %v1277 = vlaneseq
    %v1278 = vshrl.u32 %v1277, 7
    %v1279 = vsub.s32 %v1276, %v1278
    %v1280 = vrot.slane %v1272, %v1279
    %v1282 = vunpack.c.l.s4 1983009808
    %v1283 = vunpack.c.0.s8 %v1282
    %v1284 = vlaneseq
    %v1285 = vshrl.u32 %v1284, 7
    %v1286 = vsub.s32 %v1283, %v1285
    %v1287 = vrot.slane %v1273, %v1286
    %v1288 = vcombine.low %v1232, %v1248
    %v1289 = vcombine.high %v1232, %v1248
    %v1291 = vunpack.c.l.s4 1934713408
    %v1292 = vunpack.c.0.s8 %v1291
    %v1293 = vlaneseq
    %v1294 = vshrl.u32 %v1293, 7
    %v1295 = vsub.s32 %v1292, %v1294
    %v1296 = vrot.slane %v1288, %v1295
    %v1298 = vunpack.c.l.s4 1934713408
    %v1299 = vunpack.c.0.s8 %v1298
    %v1300 = vlaneseq
    %v1301 = vshrl.u32 %v1300, 7
    %v1302 = vsub.s32 %v1299, %v1301
    %v1303 = vrot.slane %v1289, %v1302
    %v1304 = vcombine.low %v1239, %v1255
    %v1305 = vcombine.high %v1239, %v1255
    %v1307 = vunpack.c.l.s4 1934713408
    %v1308 = vunpack.c.0.s8 %v1307
    %v1309 = vlaneseq
    %v1310 = vshrl.u32 %v1309, 7
    %v1311 = vsub.s32 %v1308, %v1310
    %v1312 = vrot.slane %v1304, %v1311
    %v1314 = vunpack.c.l.s4 1934713408
    %v1315 = vunpack.c.0.s8 %v1314
    %v1316 = vlaneseq
    %v1317 = vshrl.u32 %v1316, 7
    %v1318 = vsub.s32 %v1315, %v1317
    %v1319 = vrot.slane %v1305, %v1318
    %v1320 = vcombine.low %v1264, %v1280
    %v1321 = vcombine.high %v1264, %v1280
    %v1323 = vunpack.c.l.s4 1934713408
    %v1324 = vunpack.c.0.s8 %v1323
    %v1325 = vlaneseq
    %v1326 = vshrl.u32 %v1325, 7
    %v1327 = vsub.s32 %v1324, %v1326
    %v1328 = vrot.slane %v1320, %v1327
    %v1330 = vunpack.c.l.s4 1934713408
    %v1331 = vunpack.c.0.s8 %v1330
    %v1332 = vlaneseq
    %v1333 = vshrl.u32 %v1332, 7
    %v1334 = vsub.s32 %v1331, %v1333
    %v1335 = vrot.slane %v1321, %v1334
    %v1336 = vcombine.low %v1271, %v1287
    %v1337 = vcombine.high %v1271, %v1287
    %v1339 = vunpack.c.l.s4 1934713408
    %v1340 = vunpack.c.0.s8 %v1339
    %v1341 = vlaneseq
    %v1342 = vshrl.u32 %v1341, 7
    %v1343 = vsub.s32 %v1340, %v1342
    %v1344 = vrot.slane %v1336, %v1343
    %v1346 = vunpack.c.l.s4 1934713408
    %v1347 = vunpack.c.0.s8 %v1346
    %v1348 = vlaneseq
    %v1349 = vshrl.u32 %v1348, 7
    %v1350 = vsub.s32 %v1347, %v1349
    %v1351 = vrot.slane %v1337, %v1350
    %v1352 = vcombine.low %v1296, %v1328
    %v1353 = vcombine.high %v1296, %v1328
    %v1354 = vcombine.low %v1303, %v1335
    %v1355 = vcombine.high %v1303, %v1335
    %v1356 = vcombine.low %v1312, %v1344
    %v1357 = vcombine.high %v1312, %v1344
    %v1358 = vcombine.low %v1319, %v1351
    %v1359 = vcombine.high %v1319, %v1351
    %v1360 = vcombine.low %v1097, %v1129
    %v1361 = vcombine.high %v1097, %v1129
    %v1363 = vunpack.c.l.s4 1983009808
    %v1364 = vunpack.c.0.s8 %v1363
    %v1365 = vlaneseq
    %v1366 = vshrl.u32 %v1365, 7
    %v1367 = vsub.s32 %v1364, %v1366
    %v1368 = vrot.slane %v1360, %v1367
    %v1370 = vunpack.c.l.s4 1983009808
    %v1371 = vunpack.c.0.s8 %v1370
    %v1372 = vlaneseq
    %v1373 = vshrl.u32 %v1372, 7
    %v1374 = vsub.s32 %v1371, %v1373
    %v1375 = vrot.slane %v1361, %v1374
    %v1376 = vcombine.low %v1113, %v1145
    %v1377 = vcombine.high %v1113, %v1145
    %v1379 = vunpack.c.l.s4 1983009808
    %v1380 = vunpack.c.0.s8 %v1379
    %v1381 = vlaneseq
    %v1382 = vshrl.u32 %v1381, 7
    %v1383 = vsub.s32 %v1380, %v1382
    %v1384 = vrot.slane %v1376, %v1383
    %v1386 = vunpack.c.l.s4 1983009808
    %v1387 = vunpack.c.0.s8 %v1386
    %v1388 = vlaneseq
    %v1389 = vshrl.u32 %v1388, 7
    %v1390 = vsub.s32 %v1387, %v1389
    %v1391 = vrot.slane %v1377, %v1390
    %v1392 = vcombine.low %v1161, %v1193
    %v1393 = vcombine.high %v1161, %v1193
    %v1395 = vunpack.c.l.s4 1983009808
    %v1396 = vunpack.c.0.s8 %v1395
    %v1397 = vlaneseq
    %v1398 = vshrl.u32 %v1397, 7
    %v1399 = vsub.s32 %v1396, %v1398
    %v1400 = vrot.slane %v1392, %v1399
    %v1402 = vunpack.c.l.s4 1983009808
    %v1403 = vunpack.c.0.s8 %v1402
    %v1404 = vlaneseq
    %v1405 = vshrl.u32 %v1404, 7
    %v1406 = vsub.s32 %v1403, %v1405
    %v1407 = vrot.slane %v1393, %v1406
    %v1408 = vcombine.low %v1177, %v1209
    %v1409 = vcombine.high %v1177, %v1209
    %v1411 = vunpack.c.l.s4 1983009808
    %v1412 = vunpack.c.0.s8 %v1411
    %v1413 = vlaneseq
    %v1414 = vshrl.u32 %v1413, 7
    %v1415 = vsub.s32 %v1412, %v1414
    %v1416 = vrot.slane %v1408, %v1415
    %v1418 = vunpack.c.l.s4 1983009808
    %v1419 = vunpack.c.0.s8 %v1418
    %v1420 = vlaneseq
    %v1421 = vshrl.u32 %v1420, 7
    %v1422 = vsub.s32 %v1419, %v1421
    %v1423 = vrot.slane %v1409, %v1422
    %v1424 = vcombine.low %v1368, %v1384
    %v1425 = vcombine.high %v1368, %v1384
    %v1427 = vunpack.c.l.s4 1934713408
    %v1428 = vunpack.c.0.s8 %v1427
    %v1429 = vlaneseq
    %v1430 = vshrl.u32 %v1429, 7
    %v1431 = vsub.s32 %v1428, %v1430
    %v1432 = vrot.slane %v1424, %v1431
    %v1434 = vunpack.c.l.s4 1934713408
    %v1435 = vunpack.c.0.s8 %v1434
    %v1436 = vlaneseq
    %v1437 = vshrl.u32 %v1436, 7
    %v1438 = vsub.s32 %v1435, %v1437
    %v1439 = vrot.slane %v1425, %v1438
    %v1440 = vcombine.low %v1375, %v1391
    %v1441 = vcombine.high %v1375, %v1391
    %v1443 = vunpack.c.l.s4 1934713408
    %v1444 = vunpack.c.0.s8 %v1443
    %v1445 = vlaneseq
    %v1446 = vshrl.u32 %v1445, 7
    %v1447 = vsub.s32 %v1444, %v1446
    %v1448 = vrot.slane %v1440, %v1447
    %v1450 = vunpack.c.l.s4 1934713408
    %v1451 = vunpack.c.0.s8 %v1450
    %v1452 = vlaneseq
    %v1453 = vshrl.u32 %v1452, 7
    %v1454 = vsub.s32 %v1451, %v1453
    %v1455 = vrot.slane %v1441, %v1454
    %v1456 = vcombine.low %v1400, %v1416
    %v1457 = vcombine.high %v1400, %v1416
    %v1459 = vunpack.c.l.s4 1934713408
    %v1460 = vunpack.c.0.s8 %v1459
    %v1461 = vlaneseq
    %v1462 = vshrl.u32 %v1461, 7
    %v1463 = vsub.s32 %v1460, %v1462
    %v1464 = vrot.slane %v1456, %v1463
    %v1466 = vunpack.c.l.s4 1934713408
    %v1467 = vunpack.c.0.s8 %v1466
    %v1468 = vlaneseq
    %v1469 = vshrl.u32 %v1468, 7
    %v1470 = vsub.s32 %v1467, %v1469
    %v1471 = vrot.slane %v1457, %v1470
    %v1472 = vcombine.low %v1407, %v1423
    %v1473 = vcombine.high %v1407, %v1423
    %v1475 = vunpack.c.l.s4 1934713408
    %v1476 = vunpack.c.0.s8 %v1475
    %v1477 = vlaneseq
    %v1478 = vshrl.u32 %v1477, 7
    %v1479 = vsub.s32 %v1476, %v1478
    %v1480 = vrot.slane %v1472, %v1479
    %v1482 = vunpack.c.l.s4 1934713408
    %v1483 = vunpack.c.0.s8 %v1482
    %v1484 = vlaneseq
    %v1485 = vshrl.u32 %v1484, 7
    %v1486 = vsub.s32 %v1483, %v1485
    %v1487 = vrot.slane %v1473, %v1486
    %v1488 = vcombine.low %v1432, %v1464
    %v1489 = vcombine.high %v1432, %v1464
    %v1490 = vcombine.low %v1439, %v1471
    %v1491 = vcombine.high %v1439, %v1471
    %v1492 = vcombine.low %v1448, %v1480
    %v1493 = vcombine.high %v1448, %v1480
    %v1494 = vcombine.low %v1455, %v1487
    %v1495 = vcombine.high %v1455, %v1487
    %v1496 = vcombine.low %v1098, %v1130
    %v1497 = vcombine.high %v1098, %v1130
    %v1499 = vunpack.c.l.s4 1983009808
    %v1500 = vunpack.c.0.s8 %v1499
    %v1501 = vlaneseq
    %v1502 = vshrl.u32 %v1501, 7
    %v1503 = vsub.s32 %v1500, %v1502
    %v1504 = vrot.slane %v1496, %v1503
    %v1506 = vunpack.c.l.s4 1983009808
    %v1507 = vunpack.c.0.s8 %v1506
    %v1508 = vlaneseq
    %v1509 = vshrl.u32 %v1508, 7
    %v1510 = vsub.s32 %v1507, %v1509
    %v1511 = vrot.slane %v1497, %v1510
    %v1512 = vcombine.low %v1114, %v1146
    %v1513 = vcombine.high %v1114, %v1146
    %v1515 = vunpack.c.l.s4 1983009808
    %v1516 = vunpack.c.0.s8 %v1515
    %v1517 = vlaneseq
    %v1518 = vshrl.u32 %v1517, 7
    %v1519 = vsub.s32 %v1516, %v1518
    %v1520 = vrot.slane %v1512, %v1519
    %v1522 = vunpack.c.l.s4 1983009808
    %v1523 = vunpack.c.0.s8 %v1522
    %v1524 = vlaneseq
    %v1525 = vshrl.u32 %v1524, 7
    %v1526 = vsub.s32 %v1523, %v1525
    %v1527 = vrot.slane %v1513, %v1526
    %v1528 = vcombine.low %v1162, %v1194
    %v1529 = vcombine.high %v1162, %v1194
    %v1531 = vunpack.c.l.s4 1983009808
    %v1532 = vunpack.c.0.s8 %v1531
    %v1533 = vlaneseq
    %v1534 = vshrl.u32 %v1533, 7
    %v1535 = vsub.s32 %v1532, %v1534
    %v1536 = vrot.slane %v1528, %v1535
    %v1538 = vunpack.c.l.s4 1983009808
    %v1539 = vunpack.c.0.s8 %v1538
    %v1540 = vlaneseq
    %v1541 = vshrl.u32 %v1540, 7
    %v1542 = vsub.s32 %v1539, %v1541
    %v1543 = vrot.slane %v1529, %v1542
    %v1544 = vcombine.low %v1178, %v1210
    %v1545 = vcombine.high %v1178, %v1210
    %v1547 = vunpack.c.l.s4 1983009808
    %v1548 = vunpack.c.0.s8 %v1547
    %v1549 = vlaneseq
    %v1550 = vshrl.u32 %v1549, 7
    %v1551 = vsub.s32 %v1548, %v1550
    %v1552 = vrot.slane %v1544, %v1551
    %v1554 = vunpack.c.l.s4 1983009808
    %v1555 = vunpack.c.0.s8 %v1554
    %v1556 = vlaneseq
    %v1557 = vshrl.u32 %v1556, 7
    %v1558 = vsub.s32 %v1555, %v1557
    %v1559 = vrot.slane %v1545, %v1558
    %v1560 = vcombine.low %v1504, %v1520
    %v1561 = vcombine.high %v1504, %v1520
    %v1563 = vunpack.c.l.s4 1934713408
    %v1564 = vunpack.c.0.s8 %v1563
    %v1565 = vlaneseq
    %v1566 = vshrl.u32 %v1565, 7
    %v1567 = vsub.s32 %v1564, %v1566
    %v1568 = vrot.slane %v1560, %v1567
    %v1570 = vunpack.c.l.s4 1934713408
    %v1571 = vunpack.c.0.s8 %v1570
    %v1572 = vlaneseq
    %v1573 = vshrl.u32 %v1572, 7
    %v1574 = vsub.s32 %v1571, %v1573
    %v1575 = vrot.slane %v1561, %v1574
    %v1576 = vcombine.low %v1511, %v1527
    %v1577 = vcombine.high %v1511, %v1527
    %v1579 = vunpack.c.l.s4 1934713408
    %v1580 = vunpack.c.0.s8 %v1579
    %v1581 = vlaneseq
    %v1582 = vshrl.u32 %v1581, 7
    %v1583 = vsub.s32 %v1580, %v1582
    %v1584 = vrot.slane %v1576, %v1583
    %v1586 = vunpack.c.l.s4 1934713408
    %v1587 = vunpack.c.0.s8 %v1586
    %v1588 = vlaneseq
    %v1589 = vshrl.u32 %v1588, 7
    %v1590 = vsub.s32 %v1587, %v1589
    %v1591 = vrot.slane %v1577, %v1590
    %v1592 = vcombine.low %v1536, %v1552
    %v1593 = vcombine.high %v1536, %v1552
    %v1595 = vunpack.c.l.s4 1934713408
    %v1596 = vunpack.c.0.s8 %v1595
    %v1597 = vlaneseq
    %v1598 = vshrl.u32 %v1597, 7
    %v1599 = vsub.s32 %v1596, %v1598
    %v1600 = vrot.slane %v1592, %v1599
    %v1602 = vunpack.c.l.s4 1934713408
    %v1603 = vunpack.c.0.s8 %v1602
    %v1604 = vlaneseq
    %v1605 = vshrl.u32 %v1604, 7
    %v1606 = vsub.s32 %v1603, %v1605
    %v1607 = vrot.slane %v1593, %v1606
    %v1608 = vcombine.low %v1543, %v1559
    %v1609 = vcombine.high %v1543, %v1559
    %v1611 = vunpack.c.l.s4 1934713408
    %v1612 = vunpack.c.0.s8 %v1611
    %v1613 = vlaneseq
    %v1614 = vshrl.u32 %v1613, 7
    %v1615 = vsub.s32 %v1612, %v1614
    %v1616 = vrot.slane %v1608, %v1615
    %v1618 = vunpack.c.l.s4 1934713408
    %v1619 = vunpack.c.0.s8 %v1618
    %v1620 = vlaneseq
    %v1621 = vshrl.u32 %v1620, 7
    %v1622 = vsub.s32 %v1619, %v1621
    %v1623 = vrot.slane %v1609, %v1622
    %v1624 = vcombine.low %v1568, %v1600
    %v1625 = vcombine.high %v1568, %v1600
    %v1626 = vcombine.low %v1575, %v1607
    %v1627 = vcombine.high %v1575, %v1607
    %v1628 = vcombine.low %v1584, %v1616
    %v1629 = vcombine.high %v1584, %v1616
    %v1630 = vcombine.low %v1591, %v1623
    %v1631 = vcombine.high %v1591, %v1623
    %v1632 = vcombine.low %v1099, %v1131
    %v1633 = vcombine.high %v1099, %v1131
    %v1635 = vunpack.c.l.s4 1983009808
    %v1636 = vunpack.c.0.s8 %v1635
    %v1637 = vlaneseq
    %v1638 = vshrl.u32 %v1637, 7
    %v1639 = vsub.s32 %v1636, %v1638
    %v1640 = vrot.slane %v1632, %v1639
    %v1642 = vunpack.c.l.s4 1983009808
    %v1643 = vunpack.c.0.s8 %v1642
    %v1644 = vlaneseq
    %v1645 = vshrl.u32 %v1644, 7
    %v1646 = vsub.s32 %v1643, %v1645
    %v1647 = vrot.slane %v1633, %v1646
    %v1648 = vcombine.low %v1115, %v1147
    %v1649 = vcombine.high %v1115, %v1147
    %v1651 = vunpack.c.l.s4 1983009808
    %v1652 = vunpack.c.0.s8 %v1651
    %v1653 = vlaneseq
    %v1654 = vshrl.u32 %v1653, 7
    %v1655 = vsub.s32 %v1652, %v1654
    %v1656 = vrot.slane %v1648, %v1655
    %v1658 = vunpack.c.l.s4 1983009808
    %v1659 = vunpack.c.0.s8 %v1658
    %v1660 = vlaneseq
    %v1661 = vshrl.u32 %v1660, 7
    %v1662 = vsub.s32 %v1659, %v1661
    %v1663 = vrot.slane %v1649, %v1662
    %v1664 = vcombine.low %v1163, %v1195
    %v1665 = vcombine.high %v1163, %v1195
    %v1667 = vunpack.c.l.s4 1983009808
    %v1668 = vunpack.c.0.s8 %v1667
    %v1669 = vlaneseq
    %v1670 = vshrl.u32 %v1669, 7
    %v1671 = vsub.s32 %v1668, %v1670
    %v1672 = vrot.slane %v1664, %v1671
    %v1674 = vunpack.c.l.s4 1983009808
    %v1675 = vunpack.c.0.s8 %v1674
    %v1676 = vlaneseq
    %v1677 = vshrl.u32 %v1676, 7
    %v1678 = vsub.s32 %v1675, %v1677
    %v1679 = vrot.slane %v1665, %v1678
    %v1680 = vcombine.low %v1179, %v1211
    %v1681 = vcombine.high %v1179, %v1211
    %v1683 = vunpack.c.l.s4 1983009808
    %v1684 = vunpack.c.0.s8 %v1683
    %v1685 = vlaneseq
    %v1686 = vshrl.u32 %v1685, 7
    %v1687 = vsub.s32 %v1684, %v1686
    %v1688 = vrot.slane %v1680, %v1687
    %v1690 = vunpack.c.l.s4 1983009808
    %v1691 = vunpack.c.0.s8 %v1690
    %v1692 = vlaneseq
    %v1693 = vshrl.u32 %v1692, 7
    %v1694 = vsub.s32 %v1691, %v1693
    %v1695 = vrot.slane %v1681, %v1694
    %v1696 = vcombine.low %v1640, %v1656
    %v1697 = vcombine.high %v1640, %v1656
    %v1699 = vunpack.c.l.s4 1934713408
    %v1700 = vunpack.c.0.s8 %v1699
    %v1701 = vlaneseq
    %v1702 = vshrl.u32 %v1701, 7
    %v1703 = vsub.s32 %v1700, %v1702
    %v1704 = vrot.slane %v1696, %v1703
    %v1706 = vunpack.c.l.s4 1934713408
    %v1707 = vunpack.c.0.s8 %v1706
    %v1708 = vlaneseq
    %v1709 = vshrl.u32 %v1708, 7
    %v1710 = vsub.s32 %v1707, %v1709
    %v1711 = vrot.slane %v1697, %v1710
    %v1712 = vcombine.low %v1647, %v1663
    %v1713 = vcombine.high %v1647, %v1663
    %v1715 = vunpack.c.l.s4 1934713408
    %v1716 = vunpack.c.0.s8 %v1715
    %v1717 = vlaneseq
    %v1718 = vshrl.u32 %v1717, 7
    %v1719 = vsub.s32 %v1716, %v1718
    %v1720 = vrot.slane %v1712, %v1719
    %v1722 = vunpack.c.l.s4 1934713408
    %v1723 = vunpack.c.0.s8 %v1722
    %v1724 = vlaneseq
    %v1725 = vshrl.u32 %v1724, 7
    %v1726 = vsub.s32 %v1723, %v1725
    %v1727 = vrot.slane %v1713, %v1726
    %v1728 = vcombine.low %v1672, %v1688
    %v1729 = vcombine.high %v1672, %v1688
    %v1731 = vunpack.c.l.s4 1934713408
    %v1732 = vunpack.c.0.s8 %v1731
    %v1733 = vlaneseq
    %v1734 = vshrl.u32 %v1733, 7
    %v1735 = vsub.s32 %v1732, %v1734
    %v1736 = vrot.slane %v1728, %v1735
    %v1738 = vunpack.c.l.s4 1934713408
    %v1739 = vunpack.c.0.s8 %v1738
    %v1740 = vlaneseq
    %v1741 = vshrl.u32 %v1740, 7
    %v1742 = vsub.s32 %v1739, %v1741
    %v1743 = vrot.slane %v1729, %v1742
    %v1744 = vcombine.low %v1679, %v1695
    %v1745 = vcombine.high %v1679, %v1695
    %v1747 = vunpack.c.l.s4 1934713408
    %v1748 = vunpack.c.0.s8 %v1747
    %v1749 = vlaneseq
    %v1750 = vshrl.u32 %v1749, 7
    %v1751 = vsub.s32 %v1748, %v1750
    %v1752 = vrot.slane %v1744, %v1751
    %v1754 = vunpack.c.l.s4 1934713408
    %v1755 = vunpack.c.0.s8 %v1754
    %v1756 = vlaneseq
    %v1757 = vshrl.u32 %v1756, 7
    %v1758 = vsub.s32 %v1755, %v1757
    %v1759 = vrot.slane %v1745, %v1758
    %v1760 = vcombine.low %v1704, %v1736
    %v1761 = vcombine.high %v1704, %v1736
    %v1762 = vcombine.low %v1711, %v1743
    %v1763 = vcombine.high %v1711, %v1743
    %v1764 = vcombine.low %v1720, %v1752
    %v1765 = vcombine.high %v1720, %v1752
    %v1766 = vcombine.low %v1727, %v1759
    %v1767 = vcombine.high %v1727, %v1759
    %v1768 = vcombine.low %v1100, %v1132
    %v1769 = vcombine.high %v1100, %v1132
    %v1771 = vunpack.c.l.s4 1983009808
    %v1772 = vunpack.c.0.s8 %v1771
    %v1773 = vlaneseq
    %v1774 = vshrl.u32 %v1773, 7
    %v1775 = vsub.s32 %v1772, %v1774
    %v1776 = vrot.slane %v1768, %v1775
    %v1778 = vunpack.c.l.s4 1983009808
    %v1779 = vunpack.c.0.s8 %v1778
    %v1780 = vlaneseq
    %v1781 = vshrl.u32 %v1780, 7
    %v1782 = vsub.s32 %v1779, %v1781
    %v1783 = vrot.slane %v1769, %v1782
    %v1784 = vcombine.low %v1116, %v1148
    %v1785 = vcombine.high %v1116, %v1148
    %v1787 = vunpack.c.l.s4 1983009808
    %v1788 = vunpack.c.0.s8 %v1787
    %v1789 = vlaneseq
    %v1790 = vshrl.u32 %v1789, 7
    %v1791 = vsub.s32 %v1788, %v1790
    %v1792 = vrot.slane %v1784, %v1791
    %v1794 = vunpack.c.l.s4 1983009808
    %v1795 = vunpack.c.0.s8 %v1794
    %v1796 = vlaneseq
    %v1797 = vshrl.u32 %v1796, 7
    %v1798 = vsub.s32 %v1795, %v1797
    %v1799 = vrot.slane %v1785, %v1798
    %v1800 = vcombine.low %v1164, %v1196
    %v1801 = vcombine.high %v1164, %v1196
    %v1803 = vunpack.c.l.s4 1983009808
    %v1804 = vunpack.c.0.s8 %v1803
    %v1805 = vlaneseq
    %v1806 = vshrl.u32 %v1805, 7
    %v1807 = vsub.s32 %v1804, %v1806
    %v1808 = vrot.slane %v1800, %v1807
    %v1810 = vunpack.c.l.s4 1983009808
    %v1811 = vunpack.c.0.s8 %v1810
    %v1812 = vlaneseq
    %v1813 = vshrl.u32 %v1812, 7
    %v1814 = vsub.s32 %v1811, %v1813
    %v1815 = vrot.slane %v1801, %v1814
    %v1816 = vcombine.low %v1180, %v1212
    %v1817 = vcombine.high %v1180, %v1212
    %v1819 = vunpack.c.l.s4 1983009808
    %v1820 = vunpack.c.0.s8 %v1819
    %v1821 = vlaneseq
    %v1822 = vshrl.u32 %v1821, 7
    %v1823 = vsub.s32 %v1820, %v1822
    %v1824 = vrot.slane %v1816, %v1823
    %v1826 = vunpack.c.l.s4 1983009808
    %v1827 = vunpack.c.0.s8 %v1826
    %v1828 = vlaneseq
    %v1829 = vshrl.u32 %v1828, 7
    %v1830 = vsub.s32 %v1827, %v1829
    %v1831 = vrot.slane %v1817, %v1830
    %v1832 = vcombine.low %v1776, %v1792
    %v1833 = vcombine.high %v1776, %v1792
    %v1835 = vunpack.c.l.s4 1934713408
    %v1836 = vunpack.c.0.s8 %v1835
    %v1837 = vlaneseq
    %v1838 = vshrl.u32 %v1837, 7
    %v1839 = vsub.s32 %v1836, %v1838
    %v1840 = vrot.slane %v1832, %v1839
    %v1842 = vunpack.c.l.s4 1934713408
    %v1843 = vunpack.c.0.s8 %v1842
    %v1844 = vlaneseq
    %v1845 = vshrl.u32 %v1844, 7
    %v1846 = vsub.s32 %v1843, %v1845
    %v1847 = vrot.slane %v1833, %v1846
    %v1848 = vcombine.low %v1783, %v1799
    %v1849 = vcombine.high %v1783, %v1799
    %v1851 = vunpack.c.l.s4 1934713408
    %v1852 = vunpack.c.0.s8 %v1851
    %v1853 = vlaneseq
    %v1854 = vshrl.u32 %v1853, 7
    %v1855 = vsub.s32 %v1852, %v1854
    %v1856 = vrot.slane %v1848, %v1855
    %v1858 = vunpack.c.l.s4 1934713408
    %v1859 = vunpack.c.0.s8 %v1858
    %v1860 = vlaneseq
    %v1861 = vshrl.u32 %v1860, 7
    %v1862 = vsub.s32 %v1859, %v1861
    %v1863 = vrot.slane %v1849, %v1862
    %v1864 = vcombine.low %v1808, %v1824
    %v1865 = vcombine.high %v1808, %v1824
    %v1867 = vunpack.c.l.s4 1934713408
    %v1868 = vunpack.c.0.s8 %v1867
    %v1869 = vlaneseq
    %v1870 = vshrl.u32 %v1869, 7
    %v1871 = vsub.s32 %v1868, %v1870
    %v1872 = vrot.slane %v1864, %v1871
    %v1874 = vunpack.c.l.s4 1934713408
    %v1875 = vunpack.c.0.s8 %v1874
    %v1876 = vlaneseq
    %v1877 = vshrl.u32 %v1876, 7
    %v1878 = vsub.s32 %v1875, %v1877
    %v1879 = vrot.slane %v1865, %v1878
    %v1880 = vcombine.low %v1815, %v1831
    %v1881 = vcombine.high %v1815, %v1831
    %v1883 = vunpack.c.l.s4 1934713408
    %v1884 = vunpack.c.0.s8 %v1883
    %v1885 = vlaneseq
    %v1886 = vshrl.u32 %v1885, 7
    %v1887 = vsub.s32 %v1884, %v1886
    %v1888 = vrot.slane %v1880, %v1887
    %v1890 = vunpack.c.l.s4 1934713408
    %v1891 = vunpack.c.0.s8 %v1890
    %v1892 = vlaneseq
    %v1893 = vshrl.u32 %v1892, 7
    %v1894 = vsub.s32 %v1891, %v1893
    %v1895 = vrot.slane %v1881, %v1894
    %v1896 = vcombine.low %v1840, %v1872
    %v1897 = vcombine.high %v1840, %v1872
    %v1898 = vcombine.low %v1847, %v1879
    %v1899 = vcombine.high %v1847, %v1879
    %v1900 = vcombine.low %v1856, %v1888
    %v1901 = vcombine.high %v1856, %v1888
    %v1902 = vcombine.low %v1863, %v1895
    %v1903 = vcombine.high %v1863, %v1895
    %v1904 = vcombine.low %v1101, %v1133
    %v1905 = vcombine.high %v1101, %v1133
    %v1907 = vunpack.c.l.s4 1983009808
    %v1908 = vunpack.c.0.s8 %v1907
    %v1909 = vlaneseq
    %v1910 = vshrl.u32 %v1909, 7
    %v1911 = vsub.s32 %v1908, %v1910
    %v1912 = vrot.slane %v1904, %v1911
    %v1914 = vunpack.c.l.s4 1983009808
    %v1915 = vunpack.c.0.s8 %v1914
    %v1916 = vlaneseq
    %v1917 = vshrl.u32 %v1916, 7
    %v1918 = vsub.s32 %v1915, %v1917
    %v1919 = vrot.slane %v1905, %v1918
    %v1920 = vcombine.low %v1117, %v1149
    %v1921 = vcombine.high %v1117, %v1149
    %v1923 = vunpack.c.l.s4 1983009808
    %v1924 = vunpack.c.0.s8 %v1923
    %v1925 = vlaneseq
    %v1926 = vshrl.u32 %v1925, 7
    %v1927 = vsub.s32 %v1924, %v1926
    %v1928 = vrot.slane %v1920, %v1927
    %v1930 = vunpack.c.l.s4 1983009808
    %v1931 = vunpack.c.0.s8 %v1930
    %v1932 = vlaneseq
    %v1933 = vshrl.u32 %v1932, 7
    %v1934 = vsub.s32 %v1931, %v1933
    %v1935 = vrot.slane %v1921, %v1934
    %v1936 = vcombine.low %v1165, %v1197
    %v1937 = vcombine.high %v1165, %v1197
    %v1939 = vunpack.c.l.s4 1983009808
    %v1940 = vunpack.c.0.s8 %v1939
    %v1941 = vlaneseq
    %v1942 = vshrl.u32 %v1941, 7
    %v1943 = vsub.s32 %v1940, %v1942
    %v1944 = vrot.slane %v1936, %v1943
    %v1946 = vunpack.c.l.s4 1983009808
    %v1947 = vunpack.c.0.s8 %v1946
    %v1948 = vlaneseq
    %v1949 = vshrl.u32 %v1948, 7
    %v1950 = vsub.s32 %v1947, %v1949
    %v1951 = vrot.slane %v1937, %v1950
    %v1952 = vcombine.low %v1181, %v1213
    %v1953 = vcombine.high %v1181, %v1213
    %v1955 = vunpack.c.l.s4 1983009808
    %v1956 = vunpack.c.0.s8 %v1955
    %v1957 = vlaneseq
    %v1958 = vshrl.u32 %v1957, 7
    %v1959 = vsub.s32 %v1956, %v1958
    %v1960 = vrot.slane %v1952, %v1959
    %v1962 = vunpack.c.l.s4 1983009808
    %v1963 = vunpack.c.0.s8 %v1962
    %v1964 = vlaneseq
    %v1965 = vshrl.u32 %v1964, 7
    %v1966 = vsub.s32 %v1963, %v1965
    %v1967 = vrot.slane %v1953, %v1966
    %v1968 = vcombine.low %v1912, %v1928
    %v1969 = vcombine.high %v1912, %v1928
    %v1971 = vunpack.c.l.s4 1934713408
    %v1972 = vunpack.c.0.s8 %v1971
    %v1973 = vlaneseq
    %v1974 = vshrl.u32 %v1973, 7
    %v1975 = vsub.s32 %v1972, %v1974
    %v1976 = vrot.slane %v1968, %v1975
    %v1978 = vunpack.c.l.s4 1934713408
    %v1979 = vunpack.c.0.s8 %v1978
    %v1980 = vlaneseq
    %v1981 = vshrl.u32 %v1980, 7
    %v1982 = vsub.s32 %v1979, %v1981
    %v1983 = vrot.slane %v1969, %v1982
    %v1984 = vcombine.low %v1919, %v1935
    %v1985 = vcombine.high %v1919, %v1935
    %v1987 = vunpack.c.l.s4 1934713408
    %v1988 = vunpack.c.0.s8 %v1987
    %v1989 = vlaneseq
    %v1990 = vshrl.u32 %v1989, 7
    %v1991 = vsub.s32 %v1988, %v1990
    %v1992 = vrot.slane %v1984, %v1991
    %v1994 = vunpack.c.l.s4 1934713408
    %v1995 = vunpack.c.0.s8 %v1994
    %v1996 = vlaneseq
    %v1997 = vshrl.u32 %v1996, 7
    %v1998 = vsub.s32 %v1995, %v1997
    %v1999 = vrot.slane %v1985, %v1998
    %v2000 = vcombine.low %v1944, %v1960
    %v2001 = vcombine.high %v1944, %v1960
    %v2003 = vunpack.c.l.s4 1934713408
    %v2004 = vunpack.c.0.s8 %v2003
    %v2005 = vlaneseq
    %v2006 = vshrl.u32 %v2005, 7
    %v2007 = vsub.s32 %v2004, %v2006
    %v2008 = vrot.slane %v2000, %v2007
    %v2010 = vunpack.c.l.s4 1934713408
    %v2011 = vunpack.c.0.s8 %v2010
    %v2012 = vlaneseq
    %v2013 = vshrl.u32 %v2012, 7
    %v2014 = vsub.s32 %v2011, %v2013
    %v2015 = vrot.slane %v2001, %v2014
    %v2016 = vcombine.low %v1951, %v1967
    %v2017 = vcombine.high %v1951, %v1967
    %v2019 = vunpack.c.l.s4 1934713408
    %v2020 = vunpack.c.0.s8 %v2019
    %v2021 = vlaneseq
    %v2022 = vshrl.u32 %v2021, 7
    %v2023 = vsub.s32 %v2020, %v2022
    %v2024 = vrot.slane %v2016, %v2023
    %v2026 = vunpack.c.l.s4 1934713408
    %v2027 = vunpack.c.0.s8 %v2026
    %v2028 = vlaneseq
    %v2029 = vshrl.u32 %v2028, 7
    %v2030 = vsub.s32 %v2027, %v2029
    %v2031 = vrot.slane %v2017, %v2030
    %v2032 = vcombine.low %v1976, %v2008
    %v2033 = vcombine.high %v1976, %v2008
    %v2034 = vcombine.low %v1983, %v2015
    %v2035 = vcombine.high %v1983, %v2015
    %v2036 = vcombine.low %v1992, %v2024
    %v2037 = vcombine.high %v1992, %v2024
    %v2038 = vcombine.low %v1999, %v2031
    %v2039 = vcombine.high %v1999, %v2031
    %v2040 = vcombine.low %v1102, %v1134
    %v2041 = vcombine.high %v1102, %v1134
    %v2043 = vunpack.c.l.s4 1983009808
    %v2044 = vunpack.c.0.s8 %v2043
    %v2045 = vlaneseq
    %v2046 = vshrl.u32 %v2045, 7
    %v2047 = vsub.s32 %v2044, %v2046
    %v2048 = vrot.slane %v2040, %v2047
    %v2050 = vunpack.c.l.s4 1983009808
    %v2051 = vunpack.c.0.s8 %v2050
    %v2052 = vlaneseq
    %v2053 = vshrl.u32 %v2052, 7
    %v2054 = vsub.s32 %v2051, %v2053
    %v2055 = vrot.slane %v2041, %v2054
    %v2056 = vcombine.low %v1118, %v1150
    %v2057 = vcombine.high %v1118, %v1150
    %v2059 = vunpack.c.l.s4 1983009808
    %v2060 = vunpack.c.0.s8 %v2059
    %v2061 = vlaneseq
    %v2062 = vshrl.u32 %v2061, 7
    %v2063 = vsub.s32 %v2060, %v2062
    %v2064 = vrot.slane %v2056, %v2063
    %v2066 = vunpack.c.l.s4 1983009808
    %v2067 = vunpack.c.0.s8 %v2066
    %v2068 = vlaneseq
    %v2069 = vshrl.u32 %v2068, 7
    %v2070 = vsub.s32 %v2067, %v2069
    %v2071 = vrot.slane %v2057, %v2070
    %v2072 = vcombine.low %v1166, %v1198
    %v2073 = vcombine.high %v1166, %v1198
    %v2075 = vunpack.c.l.s4 1983009808
    %v2076 = vunpack.c.0.s8 %v2075
    %v2077 = vlaneseq
    %v2078 = vshrl.u32 %v2077, 7
    %v2079 = vsub.s32 %v2076, %v2078
    %v2080 = vrot.slane %v2072, %v2079
    %v2082 = vunpack.c.l.s4 1983009808
    %v2083 = vunpack.c.0.s8 %v2082
    %v2084 = vlaneseq
    %v2085 = vshrl.u32 %v2084, 7
    %v2086 = vsub.s32 %v2083, %v2085
    %v2087 = vrot.slane %v2073, %v2086
    %v2088 = vcombine.low %v1182, %v1214
    %v2089 = vcombine.high %v1182, %v1214
    %v2091 = vunpack.c.l.s4 1983009808
    %v2092 = vunpack.c.0.s8 %v2091
    %v2093 = vlaneseq
    %v2094 = vshrl.u32 %v2093, 7
    %v2095 = vsub.s32 %v2092, %v2094
    %v2096 = vrot.slane %v2088, %v2095
    %v2098 = vunpack.c.l.s4 1983009808
    %v2099 = vunpack.c.0.s8 %v2098
    %v2100 = vlaneseq
    %v2101 = vshrl.u32 %v2100, 7
    %v2102 = vsub.s32 %v2099, %v2101
    %v2103 = vrot.slane %v2089, %v2102
    %v2104 = vcombine.low %v2048, %v2064
    %v2105 = vcombine.high %v2048, %v2064
    %v2107 = vunpack.c.l.s4 1934713408
    %v2108 = vunpack.c.0.s8 %v2107
    %v2109 = vlaneseq
    %v2110 = vshrl.u32 %v2109, 7
    %v2111 = vsub.s32 %v2108, %v2110
    %v2112 = vrot.slane %v2104, %v2111
    %v2114 = vunpack.c.l.s4 1934713408
    %v2115 = vunpack.c.0.s8 %v2114
    %v2116 = vlaneseq
    %v2117 = vshrl.u32 %v2116, 7
    %v2118 = vsub.s32 %v2115, %v2117
    %v2119 = vrot.slane %v2105, %v2118
    %v2120 = vcombine.low %v2055, %v2071
    %v2121 = vcombine.high %v2055, %v2071
    %v2123 = vunpack.c.l.s4 1934713408
    %v2124 = vunpack.c.0.s8 %v2123
    %v2125 = vlaneseq
    %v2126 = vshrl.u32 %v2125, 7
    %v2127 = vsub.s32 %v2124, %v2126
    %v2128 = vrot.slane %v2120, %v2127
    %v2130 = vunpack.c.l.s4 1934713408
    %v2131 = vunpack.c.0.s8 %v2130
    %v2132 = vlaneseq
    %v2133 = vshrl.u32 %v2132, 7
    %v2134 = vsub.s32 %v2131, %v2133
    %v2135 = vrot.slane %v2121, %v2134
    %v2136 = vcombine.low %v2080, %v2096
    %v2137 = vcombine.high %v2080, %v2096
    %v2139 = vunpack.c.l.s4 1934713408
    %v2140 = vunpack.c.0.s8 %v2139
    %v2141 = vlaneseq
    %v2142 = vshrl.u32 %v2141, 7
    %v2143 = vsub.s32 %v2140, %v2142
    %v2144 = vrot.slane %v2136, %v2143
    %v2146 = vunpack.c.l.s4 1934713408
    %v2147 = vunpack.c.0.s8 %v2146
    %v2148 = vlaneseq
    %v2149 = vshrl.u32 %v2148, 7
    %v2150 = vsub.s32 %v2147, %v2149
    %v2151 = vrot.slane %v2137, %v2150
    %v2152 = vcombine.low %v2087, %v2103
    %v2153 = vcombine.high %v2087, %v2103
    %v2155 = vunpack.c.l.s4 1934713408
    %v2156 = vunpack.c.0.s8 %v2155
    %v2157 = vlaneseq
    %v2158 = vshrl.u32 %v2157, 7
    %v2159 = vsub.s32 %v2156, %v2158
    %v2160 = vrot.slane %v2152, %v2159
    %v2162 = vunpack.c.l.s4 1934713408
    %v2163 = vunpack.c.0.s8 %v2162
    %v2164 = vlaneseq
    %v2165 = vshrl.u32 %v2164, 7
    %v2166 = vsub.s32 %v2163, %v2165
    %v2167 = vrot.slane %v2153, %v2166
    %v2168 = vcombine.low %v2112, %v2144
    %v2169 = vcombine.high %v2112, %v2144
    %v2170 = vcombine.low %v2119, %v2151
    %v2171 = vcombine.high %v2119, %v2151
    %v2172 = vcombine.low %v2128, %v2160
    %v2173 = vcombine.high %v2128, %v2160
    %v2174 = vcombine.low %v2135, %v2167
    %v2175 = vcombine.high %v2135, %v2167
    %v2176 = vcombine.low %v1103, %v1135
    %v2177 = vcombine.high %v1103, %v1135
    %v2179 = vunpack.c.l.s4 1983009808
    %v2180 = vunpack.c.0.s8 %v2179
    %v2181 = vlaneseq
    %v2182 = vshrl.u32 %v2181, 7
    %v2183 = vsub.s32 %v2180, %v2182
    %v2184 = vrot.slane %v2176, %v2183
    %v2186 = vunpack.c.l.s4 1983009808
    %v2187 = vunpack.c.0.s8 %v2186
    %v2188 = vlaneseq
    %v2189 = vshrl.u32 %v2188, 7
    %v2190 = vsub.s32 %v2187, %v2189
    %v2191 = vrot.slane %v2177, %v2190
    %v2192 = vcombine.low %v1119, %v1151
    %v2193 = vcombine.high %v1119, %v1151
    %v2195 = vunpack.c.l.s4 1983009808
    %v2196 = vunpack.c.0.s8 %v2195
    %v2197 = vlaneseq
    %v2198 = vshrl.u32 %v2197, 7
    %v2199 = vsub.s32 %v2196, %v2198
    %v2200 = vrot.slane %v2192, %v2199
    %v2202 = vunpack.c.l.s4 1983009808
    %v2203 = vunpack.c.0.s8 %v2202
    %v2204 = vlaneseq
    %v2205 = vshrl.u32 %v2204, 7
    %v2206 = vsub.s32 %v2203, %v2205
    %v2207 = vrot.slane %v2193, %v2206
    %v2208 = vcombine.low %v1167, %v1199
    %v2209 = vcombine.high %v1167, %v1199
    %v2211 = vunpack.c.l.s4 1983009808
    %v2212 = vunpack.c.0.s8 %v2211
    %v2213 = vlaneseq
    %v2214 = vshrl.u32 %v2213, 7
    %v2215 = vsub.s32 %v2212, %v2214
    %v2216 = vrot.slane %v2208, %v2215
    %v2218 = vunpack.c.l.s4 1983009808
    %v2219 = vunpack.c.0.s8 %v2218
    %v2220 = vlaneseq
    %v2221 = vshrl.u32 %v2220, 7
    %v2222 = vsub.s32 %v2219, %v2221
    %v2223 = vrot.slane %v2209, %v2222
    %v2224 = vcombine.low %v1183, %v1215
    %v2225 = vcombine.high %v1183, %v1215
    %v2227 = vunpack.c.l.s4 1983009808
    %v2228 = vunpack.c.0.s8 %v2227
    %v2229 = vlaneseq
    %v2230 = vshrl.u32 %v2229, 7
    %v2231 = vsub.s32 %v2228, %v2230
    %v2232 = vrot.slane %v2224, %v2231
    %v2234 = vunpack.c.l.s4 1983009808
    %v2235 = vunpack.c.0.s8 %v2234
    %v2236 = vlaneseq
    %v2237 = vshrl.u32 %v2236, 7
    %v2238 = vsub.s32 %v2235, %v2237
    %v2239 = vrot.slane %v2225, %v2238
    %v2240 = vcombine.low %v2184, %v2200
    %v2241 = vcombine.high %v2184, %v2200
    %v2243 = vunpack.c.l.s4 1934713408
    %v2244 = vunpack.c.0.s8 %v2243
    %v2245 = vlaneseq
    %v2246 = vshrl.u32 %v2245, 7
    %v2247 = vsub.s32 %v2244, %v2246
    %v2248 = vrot.slane %v2240, %v2247
    %v2250 = vunpack.c.l.s4 1934713408
    %v2251 = vunpack.c.0.s8 %v2250
    %v2252 = vlaneseq
    %v2253 = vshrl.u32 %v2252, 7
    %v2254 = vsub.s32 %v2251, %v2253
    %v2255 = vrot.slane %v2241, %v2254
    %v2256 = vcombine.low %v2191, %v2207
    %v2257 = vcombine.high %v2191, %v2207
    %v2259 = vunpack.c.l.s4 1934713408
    %v2260 = vunpack.c.0.s8 %v2259
    %v2261 = vlaneseq
    %v2262 = vshrl.u32 %v2261, 7
    %v2263 = vsub.s32 %v2260, %v2262
    %v2264 = vrot.slane %v2256, %v2263
    %v2266 = vunpack.c.l.s4 1934713408
    %v2267 = vunpack.c.0.s8 %v2266
    %v2268 = vlaneseq
    %v2269 = vshrl.u32 %v2268, 7
    %v2270 = vsub.s32 %v2267, %v2269
    %v2271 = vrot.slane %v2257, %v2270
    %v2272 = vcombine.low %v2216, %v2232
    %v2273 = vcombine.high %v2216, %v2232
    %v2275 = vunpack.c.l.s4 1934713408
    %v2276 = vunpack.c.0.s8 %v2275
    %v2277 = vlaneseq
    %v2278 = vshrl.u32 %v2277, 7
    %v2279 = vsub.s32 %v2276, %v2278
    %v2280 = vrot.slane %v2272, %v2279
    %v2282 = vunpack.c.l.s4 1934713408
    %v2283 = vunpack.c.0.s8 %v2282
    %v2284 = vlaneseq
    %v2285 = vshrl.u32 %v2284, 7
    %v2286 = vsub.s32 %v2283, %v2285
    %v2287 = vrot.slane %v2273, %v2286
    %v2288 = vcombine.low %v2223, %v2239
    %v2289 = vcombine.high %v2223, %v2239
    %v2291 = vunpack.c.l.s4 1934713408
    %v2292 = vunpack.c.0.s8 %v2291
    %v2293 = vlaneseq
    %v2294 = vshrl.u32 %v2293, 7
    %v2295 = vsub.s32 %v2292, %v2294
    %v2296 = vrot.slane %v2288, %v2295
    %v2298 = vunpack.c.l.s4 1934713408
    %v2299 = vunpack.c.0.s8 %v2298
    %v2300 = vlaneseq
    %v2301 = vshrl.u32 %v2300, 7
    %v2302 = vsub.s32 %v2299, %v2301
    %v2303 = vrot.slane %v2289, %v2302
    %v2304 = vcombine.low %v2248, %v2280
    %v2305 = vcombine.high %v2248, %v2280
    %v2306 = vcombine.low %v2255, %v2287
    %v2307 = vcombine.high %v2255, %v2287
    %v2308 = vcombine.low %v2264, %v2296
    %v2309 = vcombine.high %v2264, %v2296
    %v2310 = vcombine.low %v2271, %v2303
    %v2311 = vcombine.high %v2271, %v2303
    %v2312 = vcombine.low %v1104, %v1136
    %v2313 = vcombine.high %v1104, %v1136
    %v2315 = vunpack.c.l.s4 1983009808
    %v2316 = vunpack.c.0.s8 %v2315
    %v2317 = vlaneseq
    %v2318 = vshrl.u32 %v2317, 7
    %v2319 = vsub.s32 %v2316, %v2318
    %v2320 = vrot.slane %v2312, %v2319
    %v2322 = vunpack.c.l.s4 1983009808
    %v2323 = vunpack.c.0.s8 %v2322
    %v2324 = vlaneseq
    %v2325 = vshrl.u32 %v2324, 7
    %v2326 = vsub.s32 %v2323, %v2325
    %v2327 = vrot.slane %v2313, %v2326
    %v2328 = vcombine.low %v1120, %v1152
    %v2329 = vcombine.high %v1120, %v1152
    %v2331 = vunpack.c.l.s4 1983009808
    %v2332 = vunpack.c.0.s8 %v2331
    %v2333 = vlaneseq
    %v2334 = vshrl.u32 %v2333, 7
    %v2335 = vsub.s32 %v2332, %v2334
    %v2336 = vrot.slane %v2328, %v2335
    %v2338 = vunpack.c.l.s4 1983009808
    %v2339 = vunpack.c.0.s8 %v2338
    %v2340 = vlaneseq
    %v2341 = vshrl.u32 %v2340, 7
    %v2342 = vsub.s32 %v2339, %v2341
    %v2343 = vrot.slane %v2329, %v2342
    %v2344 = vcombine.low %v1168, %v1200
    %v2345 = vcombine.high %v1168, %v1200
    %v2347 = vunpack.c.l.s4 1983009808
    %v2348 = vunpack.c.0.s8 %v2347
    %v2349 = vlaneseq
    %v2350 = vshrl.u32 %v2349, 7
    %v2351 = vsub.s32 %v2348, %v2350
    %v2352 = vrot.slane %v2344, %v2351
    %v2354 = vunpack.c.l.s4 1983009808
    %v2355 = vunpack.c.0.s8 %v2354
    %v2356 = vlaneseq
    %v2357 = vshrl.u32 %v2356, 7
    %v2358 = vsub.s32 %v2355, %v2357
    %v2359 = vrot.slane %v2345, %v2358
    %v2360 = vcombine.low %v1184, %v1216
    %v2361 = vcombine.high %v1184, %v1216
    %v2363 = vunpack.c.l.s4 1983009808
    %v2364 = vunpack.c.0.s8 %v2363
    %v2365 = vlaneseq
    %v2366 = vshrl.u32 %v2365, 7
    %v2367 = vsub.s32 %v2364, %v2366
    %v2368 = vrot.slane %v2360, %v2367
    %v2370 = vunpack.c.l.s4 1983009808
    %v2371 = vunpack.c.0.s8 %v2370
    %v2372 = vlaneseq
    %v2373 = vshrl.u32 %v2372, 7
    %v2374 = vsub.s32 %v2371, %v2373
    %v2375 = vrot.slane %v2361, %v2374
    %v2376 = vcombine.low %v2320, %v2336
    %v2377 = vcombine.high %v2320, %v2336
    %v2379 = vunpack.c.l.s4 1934713408
    %v2380 = vunpack.c.0.s8 %v2379
    %v2381 = vlaneseq
    %v2382 = vshrl.u32 %v2381, 7
    %v2383 = vsub.s32 %v2380, %v2382
    %v2384 = vrot.slane %v2376, %v2383
    %v2386 = vunpack.c.l.s4 1934713408
    %v2387 = vunpack.c.0.s8 %v2386
    %v2388 = vlaneseq
    %v2389 = vshrl.u32 %v2388, 7
    %v2390 = vsub.s32 %v2387, %v2389
    %v2391 = vrot.slane %v2377, %v2390
    %v2392 = vcombine.low %v2327, %v2343
    %v2393 = vcombine.high %v2327, %v2343
    %v2395 = vunpack.c.l.s4 1934713408
    %v2396 = vunpack.c.0.s8 %v2395
    %v2397 = vlaneseq
    %v2398 = vshrl.u32 %v2397, 7
    %v2399 = vsub.s32 %v2396, %v2398
    %v2400 = vrot.slane %v2392, %v2399
    %v2402 = vunpack.c.l.s4 1934713408
    %v2403 = vunpack.c.0.s8 %v2402
    %v2404 = vlaneseq
    %v2405 = vshrl.u32 %v2404, 7
    %v2406 = vsub.s32 %v2403, %v2405
    %v2407 = vrot.slane %v2393, %v2406
    %v2408 = vcombine.low %v2352, %v2368
    %v2409 = vcombine.high %v2352, %v2368
    %v2411 = vunpack.c.l.s4 1934713408
    %v2412 = vunpack.c.0.s8 %v2411
    %v2413 = vlaneseq
    %v2414 = vshrl.u32 %v2413, 7
    %v2415 = vsub.s32 %v2412, %v2414
    %v2416 = vrot.slane %v2408, %v2415
    %v2418 = vunpack.c.l.s4 1934713408
    %v2419 = vunpack.c.0.s8 %v2418
    %v2420 = vlaneseq
    %v2421 = vshrl.u32 %v2420, 7
    %v2422 = vsub.s32 %v2419, %v2421
    %v2423 = vrot.slane %v2409, %v2422
    %v2424 = vcombine.low %v2359, %v2375
    %v2425 = vcombine.high %v2359, %v2375
    %v2427 = vunpack.c.l.s4 1934713408
    %v2428 = vunpack.c.0.s8 %v2427
    %v2429 = vlaneseq
    %v2430 = vshrl.u32 %v2429, 7
    %v2431 = vsub.s32 %v2428, %v2430
    %v2432 = vrot.slane %v2424, %v2431
    %v2434 = vunpack.c.l.s4 1934713408
    %v2435 = vunpack.c.0.s8 %v2434
    %v2436 = vlaneseq
    %v2437 = vshrl.u32 %v2436, 7
    %v2438 = vsub.s32 %v2435, %v2437
    %v2439 = vrot.slane %v2425, %v2438
    %v2440 = vcombine.low %v2384, %v2416
    %v2441 = vcombine.high %v2384, %v2416
    %v2442 = vcombine.low %v2391, %v2423
    %v2443 = vcombine.high %v2391, %v2423
    %v2444 = vcombine.low %v2400, %v2432
    %v2445 = vcombine.high %v2400, %v2432
    %v2446 = vcombine.low %v2407, %v2439
    %v2447 = vcombine.high %v2407, %v2439
    %v2448 = vcombine.low %v1105, %v1137
    %v2449 = vcombine.high %v1105, %v1137
    %v2451 = vunpack.c.l.s4 1983009808
    %v2452 = vunpack.c.0.s8 %v2451
    %v2453 = vlaneseq
    %v2454 = vshrl.u32 %v2453, 7
    %v2455 = vsub.s32 %v2452, %v2454
    %v2456 = vrot.slane %v2448, %v2455
    %v2458 = vunpack.c.l.s4 1983009808
    %v2459 = vunpack.c.0.s8 %v2458
    %v2460 = vlaneseq
    %v2461 = vshrl.u32 %v2460, 7
    %v2462 = vsub.s32 %v2459, %v2461
    %v2463 = vrot.slane %v2449, %v2462
    %v2464 = vcombine.low %v1121, %v1153
    %v2465 = vcombine.high %v1121, %v1153
    %v2467 = vunpack.c.l.s4 1983009808
    %v2468 = vunpack.c.0.s8 %v2467
    %v2469 = vlaneseq
    %v2470 = vshrl.u32 %v2469, 7
    %v2471 = vsub.s32 %v2468, %v2470
    %v2472 = vrot.slane %v2464, %v2471
    %v2474 = vunpack.c.l.s4 1983009808
    %v2475 = vunpack.c.0.s8 %v2474
    %v2476 = vlaneseq
    %v2477 = vshrl.u32 %v2476, 7
    %v2478 = vsub.s32 %v2475, %v2477
    %v2479 = vrot.slane %v2465, %v2478
    %v2480 = vcombine.low %v1169, %v1201
    %v2481 = vcombine.high %v1169, %v1201
    %v2483 = vunpack.c.l.s4 1983009808
    %v2484 = vunpack.c.0.s8 %v2483
    %v2485 = vlaneseq
    %v2486 = vshrl.u32 %v2485, 7
    %v2487 = vsub.s32 %v2484, %v2486
    %v2488 = vrot.slane %v2480, %v2487
    %v2490 = vunpack.c.l.s4 1983009808
    %v2491 = vunpack.c.0.s8 %v2490
    %v2492 = vlaneseq
    %v2493 = vshrl.u32 %v2492, 7
    %v2494 = vsub.s32 %v2491, %v2493
    %v2495 = vrot.slane %v2481, %v2494
    %v2496 = vcombine.low %v1185, %v1217
    %v2497 = vcombine.high %v1185, %v1217
    %v2499 = vunpack.c.l.s4 1983009808
    %v2500 = vunpack.c.0.s8 %v2499
    %v2501 = vlaneseq
    %v2502 = vshrl.u32 %v2501, 7
    %v2503 = vsub.s32 %v2500, %v2502
    %v2504 = vrot.slane %v2496, %v2503
    %v2506 = vunpack.c.l.s4 1983009808
    %v2507 = vunpack.c.0.s8 %v2506
    %v2508 = vlaneseq
    %v2509 = vshrl.u32 %v2508, 7
    %v2510 = vsub.s32 %v2507, %v2509
    %v2511 = vrot.slane %v2497, %v2510
    %v2512 = vcombine.low %v2456, %v2472
    %v2513 = vcombine.high %v2456, %v2472
    %v2515 = vunpack.c.l.s4 1934713408
    %v2516 = vunpack.c.0.s8 %v2515
    %v2517 = vlaneseq
    %v2518 = vshrl.u32 %v2517, 7
    %v2519 = vsub.s32 %v2516, %v2518
    %v2520 = vrot.slane %v2512, %v2519
    %v2522 = vunpack.c.l.s4 1934713408
    %v2523 = vunpack.c.0.s8 %v2522
    %v2524 = vlaneseq
    %v2525 = vshrl.u32 %v2524, 7
    %v2526 = vsub.s32 %v2523, %v2525
    %v2527 = vrot.slane %v2513, %v2526
    %v2528 = vcombine.low %v2463, %v2479
    %v2529 = vcombine.high %v2463, %v2479
    %v2531 = vunpack.c.l.s4 1934713408
    %v2532 = vunpack.c.0.s8 %v2531
    %v2533 = vlaneseq
    %v2534 = vshrl.u32 %v2533, 7
    %v2535 = vsub.s32 %v2532, %v2534
    %v2536 = vrot.slane %v2528, %v2535
    %v2538 = vunpack.c.l.s4 1934713408
    %v2539 = vunpack.c.0.s8 %v2538
    %v2540 = vlaneseq
    %v2541 = vshrl.u32 %v2540, 7
    %v2542 = vsub.s32 %v2539, %v2541
    %v2543 = vrot.slane %v2529, %v2542
    %v2544 = vcombine.low %v2488, %v2504
    %v2545 = vcombine.high %v2488, %v2504
    %v2547 = vunpack.c.l.s4 1934713408
    %v2548 = vunpack.c.0.s8 %v2547
    %v2549 = vlaneseq
    %v2550 = vshrl.u32 %v2549, 7
    %v2551 = vsub.s32 %v2548, %v2550
    %v2552 = vrot.slane %v2544, %v2551
    %v2554 = vunpack.c.l.s4 1934713408
    %v2555 = vunpack.c.0.s8 %v2554
    %v2556 = vlaneseq
    %v2557 = vshrl.u32 %v2556, 7
    %v2558 = vsub.s32 %v2555, %v2557
    %v2559 = vrot.slane %v2545, %v2558
    %v2560 = vcombine.low %v2495, %v2511
    %v2561 = vcombine.high %v2495, %v2511
    %v2563 = vunpack.c.l.s4 1934713408
    %v2564 = vunpack.c.0.s8 %v2563
    %v2565 = vlaneseq
    %v2566 = vshrl.u32 %v2565, 7
    %v2567 = vsub.s32 %v2564, %v2566
    %v2568 = vrot.slane %v2560, %v2567
    %v2570 = vunpack.c.l.s4 1934713408
    %v2571 = vunpack.c.0.s8 %v2570
    %v2572 = vlaneseq
    %v2573 = vshrl.u32 %v2572, 7
    %v2574 = vsub.s32 %v2571, %v2573
    %v2575 = vrot.slane %v2561, %v2574
    %v2576 = vcombine.low %v2520, %v2552
    %v2577 = vcombine.high %v2520, %v2552
    %v2578 = vcombine.low %v2527, %v2559
    %v2579 = vcombine.high %v2527, %v2559
    %v2580 = vcombine.low %v2536, %v2568
    %v2581 = vcombine.high %v2536, %v2568
    %v2582 = vcombine.low %v2543, %v2575
    %v2583 = vcombine.high %v2543, %v2575
    %v2584 = vcombine.low %v1106, %v1138
    %v2585 = vcombine.high %v1106, %v1138
    %v2587 = vunpack.c.l.s4 1983009808
    %v2588 = vunpack.c.0.s8 %v2587
    %v2589 = vlaneseq
    %v2590 = vshrl.u32 %v2589, 7
    %v2591 = vsub.s32 %v2588, %v2590
    %v2592 = vrot.slane %v2584, %v2591
    %v2594 = vunpack.c.l.s4 1983009808
    %v2595 = vunpack.c.0.s8 %v2594
    %v2596 = vlaneseq
    %v2597 = vshrl.u32 %v2596, 7
    %v2598 = vsub.s32 %v2595, %v2597
    %v2599 = vrot.slane %v2585, %v2598
    %v2600 = vcombine.low %v1122, %v1154
    %v2601 = vcombine.high %v1122, %v1154
    %v2603 = vunpack.c.l.s4 1983009808
    %v2604 = vunpack.c.0.s8 %v2603
    %v2605 = vlaneseq
    %v2606 = vshrl.u32 %v2605, 7
    %v2607 = vsub.s32 %v2604, %v2606
    %v2608 = vrot.slane %v2600, %v2607
    %v2610 = vunpack.c.l.s4 1983009808
    %v2611 = vunpack.c.0.s8 %v2610
    %v2612 = vlaneseq
    %v2613 = vshrl.u32 %v2612, 7
    %v2614 = vsub.s32 %v2611, %v2613
    %v2615 = vrot.slane %v2601, %v2614
    %v2616 = vcombine.low %v1170, %v1202
    %v2617 = vcombine.high %v1170, %v1202
    %v2619 = vunpack.c.l.s4 1983009808
    %v2620 = vunpack.c.0.s8 %v2619
    %v2621 = vlaneseq
    %v2622 = vshrl.u32 %v2621, 7
    %v2623 = vsub.s32 %v2620, %v2622
    %v2624 = vrot.slane %v2616, %v2623
    %v2626 = vunpack.c.l.s4 1983009808
    %v2627 = vunpack.c.0.s8 %v2626
    %v2628 = vlaneseq
    %v2629 = vshrl.u32 %v2628, 7
    %v2630 = vsub.s32 %v2627, %v2629
    %v2631 = vrot.slane %v2617, %v2630
    %v2632 = vcombine.low %v1186, %v1218
    %v2633 = vcombine.high %v1186, %v1218
    %v2635 = vunpack.c.l.s4 1983009808
    %v2636 = vunpack.c.0.s8 %v2635
    %v2637 = vlaneseq
    %v2638 = vshrl.u32 %v2637, 7
    %v2639 = vsub.s32 %v2636, %v2638
    %v2640 = vrot.slane %v2632, %v2639
    %v2642 = vunpack.c.l.s4 1983009808
    %v2643 = vunpack.c.0.s8 %v2642
    %v2644 = vlaneseq
    %v2645 = vshrl.u32 %v2644, 7
    %v2646 = vsub.s32 %v2643, %v2645
    %v2647 = vrot.slane %v2633, %v2646
    %v2648 = vcombine.low %v2592, %v2608
    %v2649 = vcombine.high %v2592, %v2608
    %v2651 = vunpack.c.l.s4 1934713408
    %v2652 = vunpack.c.0.s8 %v2651
    %v2653 = vlaneseq
    %v2654 = vshrl.u32 %v2653, 7
    %v2655 = vsub.s32 %v2652, %v2654
    %v2656 = vrot.slane %v2648, %v2655
    %v2658 = vunpack.c.l.s4 1934713408
    %v2659 = vunpack.c.0.s8 %v2658
    %v2660 = vlaneseq
    %v2661 = vshrl.u32 %v2660, 7
    %v2662 = vsub.s32 %v2659, %v2661
    %v2663 = vrot.slane %v2649, %v2662
    %v2664 = vcombine.low %v2599, %v2615
    %v2665 = vcombine.high %v2599, %v2615
    %v2667 = vunpack.c.l.s4 1934713408
    %v2668 = vunpack.c.0.s8 %v2667
    %v2669 = vlaneseq
    %v2670 = vshrl.u32 %v2669, 7
    %v2671 = vsub.s32 %v2668, %v2670
    %v2672 = vrot.slane %v2664, %v2671
    %v2674 = vunpack.c.l.s4 1934713408
    %v2675 = vunpack.c.0.s8 %v2674
    %v2676 = vlaneseq
    %v2677 = vshrl.u32 %v2676, 7
    %v2678 = vsub.s32 %v2675, %v2677
    %v2679 = vrot.slane %v2665, %v2678
    %v2680 = vcombine.low %v2624, %v2640
    %v2681 = vcombine.high %v2624, %v2640
    %v2683 = vunpack.c.l.s4 1934713408
    %v2684 = vunpack.c.0.s8 %v2683
    %v2685 = vlaneseq
    %v2686 = vshrl.u32 %v2685, 7
    %v2687 = vsub.s32 %v2684, %v2686
    %v2688 = vrot.slane %v2680, %v2687
    %v2690 = vunpack.c.l.s4 1934713408
    %v2691 = vunpack.c.0.s8 %v2690
    %v2692 = vlaneseq
    %v2693 = vshrl.u32 %v2692, 7
    %v2694 = vsub.s32 %v2691, %v2693
    %v2695 = vrot.slane %v2681, %v2694
    %v2696 = vcombine.low %v2631, %v2647
    %v2697 = vcombine.high %v2631, %v2647
    %v2699 = vunpack.c.l.s4 1934713408
    %v2700 = vunpack.c.0.s8 %v2699
    %v2701 = vlaneseq
    %v2702 = vshrl.u32 %v2701, 7
    %v2703 = vsub.s32 %v2700, %v2702
    %v2704 = vrot.slane %v2696, %v2703
    %v2706 = vunpack.c.l.s4 1934713408
    %v2707 = vunpack.c.0.s8 %v2706
    %v2708 = vlaneseq
    %v2709 = vshrl.u32 %v2708, 7
    %v2710 = vsub.s32 %v2707, %v2709
    %v2711 = vrot.slane %v2697, %v2710
    %v2712 = vcombine.low %v2656, %v2688
    %v2713 = vcombine.high %v2656, %v2688
    %v2714 = vcombine.low %v2663, %v2695
    %v2715 = vcombine.high %v2663, %v2695
    %v2716 = vcombine.low %v2672, %v2704
    %v2717 = vcombine.high %v2672, %v2704
    %v2718 = vcombine.low %v2679, %v2711
    %v2719 = vcombine.high %v2679, %v2711
    %v2720 = vcombine.low %v1107, %v1139
    %v2721 = vcombine.high %v1107, %v1139
    %v2723 = vunpack.c.l.s4 1983009808
    %v2724 = vunpack.c.0.s8 %v2723
    %v2725 = vlaneseq
    %v2726 = vshrl.u32 %v2725, 7
    %v2727 = vsub.s32 %v2724, %v2726
    %v2728 = vrot.slane %v2720, %v2727
    %v2730 = vunpack.c.l.s4 1983009808
    %v2731 = vunpack.c.0.s8 %v2730
    %v2732 = vlaneseq
    %v2733 = vshrl.u32 %v2732, 7
    %v2734 = vsub.s32 %v2731, %v2733
    %v2735 = vrot.slane %v2721, %v2734
    %v2736 = vcombine.low %v1123, %v1155
    %v2737 = vcombine.high %v1123, %v1155
    %v2739 = vunpack.c.l.s4 1983009808
    %v2740 = vunpack.c.0.s8 %v2739
    %v2741 = vlaneseq
    %v2742 = vshrl.u32 %v2741, 7
    %v2743 = vsub.s32 %v2740, %v2742
    %v2744 = vrot.slane %v2736, %v2743
    %v2746 = vunpack.c.l.s4 1983009808
    %v2747 = vunpack.c.0.s8 %v2746
    %v2748 = vlaneseq
    %v2749 = vshrl.u32 %v2748, 7
    %v2750 = vsub.s32 %v2747, %v2749
    %v2751 = vrot.slane %v2737, %v2750
    %v2752 = vcombine.low %v1171, %v1203
    %v2753 = vcombine.high %v1171, %v1203
    %v2755 = vunpack.c.l.s4 1983009808
    %v2756 = vunpack.c.0.s8 %v2755
    %v2757 = vlaneseq
    %v2758 = vshrl.u32 %v2757, 7
    %v2759 = vsub.s32 %v2756, %v2758
    %v2760 = vrot.slane %v2752, %v2759
    %v2762 = vunpack.c.l.s4 1983009808
    %v2763 = vunpack.c.0.s8 %v2762
    %v2764 = vlaneseq
    %v2765 = vshrl.u32 %v2764, 7
    %v2766 = vsub.s32 %v2763, %v2765
    %v2767 = vrot.slane %v2753, %v2766
    %v2768 = vcombine.low %v1187, %v1219
    %v2769 = vcombine.high %v1187, %v1219
    %v2771 = vunpack.c.l.s4 1983009808
    %v2772 = vunpack.c.0.s8 %v2771
    %v2773 = vlaneseq
    %v2774 = vshrl.u32 %v2773, 7
    %v2775 = vsub.s32 %v2772, %v2774
    %v2776 = vrot.slane %v2768, %v2775
    %v2778 = vunpack.c.l.s4 1983009808
    %v2779 = vunpack.c.0.s8 %v2778
    %v2780 = vlaneseq
    %v2781 = vshrl.u32 %v2780, 7
    %v2782 = vsub.s32 %v2779, %v2781
    %v2783 = vrot.slane %v2769, %v2782
    %v2784 = vcombine.low %v2728, %v2744
    %v2785 = vcombine.high %v2728, %v2744
    %v2787 = vunpack.c.l.s4 1934713408
    %v2788 = vunpack.c.0.s8 %v2787
    %v2789 = vlaneseq
    %v2790 = vshrl.u32 %v2789, 7
    %v2791 = vsub.s32 %v2788, %v2790
    %v2792 = vrot.slane %v2784, %v2791
    %v2794 = vunpack.c.l.s4 1934713408
    %v2795 = vunpack.c.0.s8 %v2794
    %v2796 = vlaneseq
    %v2797 = vshrl.u32 %v2796, 7
    %v2798 = vsub.s32 %v2795, %v2797
    %v2799 = vrot.slane %v2785, %v2798
    %v2800 = vcombine.low %v2735, %v2751
    %v2801 = vcombine.high %v2735, %v2751
    %v2803 = vunpack.c.l.s4 1934713408
    %v2804 = vunpack.c.0.s8 %v2803
    %v2805 = vlaneseq
    %v2806 = vshrl.u32 %v2805, 7
    %v2807 = vsub.s32 %v2804, %v2806
    %v2808 = vrot.slane %v2800, %v2807
    %v2810 = vunpack.c.l.s4 1934713408
    %v2811 = vunpack.c.0.s8 %v2810
    %v2812 = vlaneseq
    %v2813 = vshrl.u32 %v2812, 7
    %v2814 = vsub.s32 %v2811, %v2813
    %v2815 = vrot.slane %v2801, %v2814
    %v2816 = vcombine.low %v2760, %v2776
    %v2817 = vcombine.high %v2760, %v2776
    %v2819 = vunpack.c.l.s4 1934713408
    %v2820 = vunpack.c.0.s8 %v2819
    %v2821 = vlaneseq
    %v2822 = vshrl.u32 %v2821, 7
    %v2823 = vsub.s32 %v2820, %v2822
    %v2824 = vrot.slane %v2816, %v2823
    %v2826 = vunpack.c.l.s4 1934713408
    %v2827 = vunpack.c.0.s8 %v2826
    %v2828 = vlaneseq
    %v2829 = vshrl.u32 %v2828, 7
    %v2830 = vsub.s32 %v2827, %v2829
    %v2831 = vrot.slane %v2817, %v2830
    %v2832 = vcombine.low %v2767, %v2783
    %v2833 = vcombine.high %v2767, %v2783
    %v2835 = vunpack.c.l.s4 1934713408
    %v2836 = vunpack.c.0.s8 %v2835
    %v2837 = vlaneseq
    %v2838 = vshrl.u32 %v2837, 7
    %v2839 = vsub.s32 %v2836, %v2838
    %v2840 = vrot.slane %v2832, %v2839
    %v2842 = vunpack.c.l.s4 1934713408
    %v2843 = vunpack.c.0.s8 %v2842
    %v2844 = vlaneseq
    %v2845 = vshrl.u32 %v2844, 7
    %v2846 = vsub.s32 %v2843, %v2845
    %v2847 = vrot.slane %v2833, %v2846
    %v2848 = vcombine.low %v2792, %v2824
    %v2849 = vcombine.high %v2792, %v2824
    %v2850 = vcombine.low %v2799, %v2831
    %v2851 = vcombine.high %v2799, %v2831
    %v2852 = vcombine.low %v2808, %v2840
    %v2853 = vcombine.high %v2808, %v2840
    %v2854 = vcombine.low %v2815, %v2847
    %v2855 = vcombine.high %v2815, %v2847
    %v2856 = vcombine.low %v1108, %v1140
    %v2857 = vcombine.high %v1108, %v1140
    %v2859 = vunpack.c.l.s4 1983009808
    %v2860 = vunpack.c.0.s8 %v2859
    %v2861 = vlaneseq
    %v2862 = vshrl.u32 %v2861, 7
    %v2863 = vsub.s32 %v2860, %v2862
    %v2864 = vrot.slane %v2856, %v2863
    %v2866 = vunpack.c.l.s4 1983009808
    %v2867 = vunpack.c.0.s8 %v2866
    %v2868 = vlaneseq
    %v2869 = vshrl.u32 %v2868, 7
    %v2870 = vsub.s32 %v2867, %v2869
    %v2871 = vrot.slane %v2857, %v2870
    %v2872 = vcombine.low %v1124, %v1156
    %v2873 = vcombine.high %v1124, %v1156
    %v2875 = vunpack.c.l.s4 1983009808
    %v2876 = vunpack.c.0.s8 %v2875
    %v2877 = vlaneseq
    %v2878 = vshrl.u32 %v2877, 7
    %v2879 = vsub.s32 %v2876, %v2878
    %v2880 = vrot.slane %v2872, %v2879
    %v2882 = vunpack.c.l.s4 1983009808
    %v2883 = vunpack.c.0.s8 %v2882
    %v2884 = vlaneseq
    %v2885 = vshrl.u32 %v2884, 7
    %v2886 = vsub.s32 %v2883, %v2885
    %v2887 = vrot.slane %v2873, %v2886
    %v2888 = vcombine.low %v1172, %v1204
    %v2889 = vcombine.high %v1172, %v1204
    %v2891 = vunpack.c.l.s4 1983009808
    %v2892 = vunpack.c.0.s8 %v2891
    %v2893 = vlaneseq
    %v2894 = vshrl.u32 %v2893, 7
    %v2895 = vsub.s32 %v2892, %v2894
    %v2896 = vrot.slane %v2888, %v2895
    %v2898 = vunpack.c.l.s4 1983009808
    %v2899 = vunpack.c.0.s8 %v2898
    %v2900 = vlaneseq
    %v2901 = vshrl.u32 %v2900, 7
    %v2902 = vsub.s32 %v2899, %v2901
    %v2903 = vrot.slane %v2889, %v2902
    %v2904 = vcombine.low %v1188, %v1220
    %v2905 = vcombine.high %v1188, %v1220
    %v2907 = vunpack.c.l.s4 1983009808
    %v2908 = vunpack.c.0.s8 %v2907
    %v2909 = vlaneseq
    %v2910 = vshrl.u32 %v2909, 7
    %v2911 = vsub.s32 %v2908, %v2910
    %v2912 = vrot.slane %v2904, %v2911
    %v2914 = vunpack.c.l.s4 1983009808
    %v2915 = vunpack.c.0.s8 %v2914
    %v2916 = vlaneseq
    %v2917 = vshrl.u32 %v2916, 7
    %v2918 = vsub.s32 %v2915, %v2917
    %v2919 = vrot.slane %v2905, %v2918
    %v2920 = vcombine.low %v2864, %v2880
    %v2921 = vcombine.high %v2864, %v2880
    %v2923 = vunpack.c.l.s4 1934713408
    %v2924 = vunpack.c.0.s8 %v2923
    %v2925 = vlaneseq
    %v2926 = vshrl.u32 %v2925, 7
    %v2927 = vsub.s32 %v2924, %v2926
    %v2928 = vrot.slane %v2920, %v2927
    %v2930 = vunpack.c.l.s4 1934713408
    %v2931 = vunpack.c.0.s8 %v2930
    %v2932 = vlaneseq
    %v2933 = vshrl.u32 %v2932, 7
    %v2934 = vsub.s32 %v2931, %v2933
    %v2935 = vrot.slane %v2921, %v2934
    %v2936 = vcombine.low %v2871, %v2887
    %v2937 = vcombine.high %v2871, %v2887
    %v2939 = vunpack.c.l.s4 1934713408
    %v2940 = vunpack.c.0.s8 %v2939
    %v2941 = vlaneseq
    %v2942 = vshrl.u32 %v2941, 7
    %v2943 = vsub.s32 %v2940, %v2942
    %v2944 = vrot.slane %v2936, %v2943
    %v2946 = vunpack.c.l.s4 1934713408
    %v2947 = vunpack.c.0.s8 %v2946
    %v2948 = vlaneseq
    %v2949 = vshrl.u32 %v2948, 7
    %v2950 = vsub.s32 %v2947, %v2949
    %v2951 = vrot.slane %v2937, %v2950
    %v2952 = vcombine.low %v2896, %v2912
    %v2953 = vcombine.high %v2896, %v2912
    %v2955 = vunpack.c.l.s4 1934713408
    %v2956 = vunpack.c.0.s8 %v2955
    %v2957 = vlaneseq
    %v2958 = vshrl.u32 %v2957, 7
    %v2959 = vsub.s32 %v2956, %v2958
    %v2960 = vrot.slane %v2952, %v2959
    %v2962 = vunpack.c.l.s4 1934713408
    %v2963 = vunpack.c.0.s8 %v2962
    %v2964 = vlaneseq
    %v2965 = vshrl.u32 %v2964, 7
    %v2966 = vsub.s32 %v2963, %v2965
    %v2967 = vrot.slane %v2953, %v2966
    %v2968 = vcombine.low %v2903, %v2919
    %v2969 = vcombine.high %v2903, %v2919
    %v2971 = vunpack.c.l.s4 1934713408
    %v2972 = vunpack.c.0.s8 %v2971
    %v2973 = vlaneseq
    %v2974 = vshrl.u32 %v2973, 7
    %v2975 = vsub.s32 %v2972, %v2974
    %v2976 = vrot.slane %v2968, %v2975
    %v2978 = vunpack.c.l.s4 1934713408
    %v2979 = vunpack.c.0.s8 %v2978
    %v2980 = vlaneseq
    %v2981 = vshrl.u32 %v2980, 7
    %v2982 = vsub.s32 %v2979, %v2981
    %v2983 = vrot.slane %v2969, %v2982
    %v2984 = vcombine.low %v2928, %v2960
    %v2985 = vcombine.high %v2928, %v2960
    %v2986 = vcombine.low %v2935, %v2967
    %v2987 = vcombine.high %v2935, %v2967
    %v2988 = vcombine.low %v2944, %v2976
    %v2989 = vcombine.high %v2944, %v2976
    %v2990 = vcombine.low %v2951, %v2983
    %v2991 = vcombine.high %v2951, %v2983
    %v2992 = vcombine.low %v1109, %v1141
    %v2993 = vcombine.high %v1109, %v1141
    %v2995 = vunpack.c.l.s4 1983009808
    %v2996 = vunpack.c.0.s8 %v2995
    %v2997 = vlaneseq
    %v2998 = vshrl.u32 %v2997, 7
    %v2999 = vsub.s32 %v2996, %v2998
    %v3000 = vrot.slane %v2992, %v2999
    %v3002 = vunpack.c.l.s4 1983009808
    %v3003 = vunpack.c.0.s8 %v3002
    %v3004 = vlaneseq
    %v3005 = vshrl.u32 %v3004, 7
    %v3006 = vsub.s32 %v3003, %v3005
    %v3007 = vrot.slane %v2993, %v3006
    %v3008 = vcombine.low %v1125, %v1157
    %v3009 = vcombine.high %v1125, %v1157
    %v3011 = vunpack.c.l.s4 1983009808
    %v3012 = vunpack.c.0.s8 %v3011
    %v3013 = vlaneseq
    %v3014 = vshrl.u32 %v3013, 7
    %v3015 = vsub.s32 %v3012, %v3014
    %v3016 = vrot.slane %v3008, %v3015
    %v3018 = vunpack.c.l.s4 1983009808
    %v3019 = vunpack.c.0.s8 %v3018
    %v3020 = vlaneseq
    %v3021 = vshrl.u32 %v3020, 7
    %v3022 = vsub.s32 %v3019, %v3021
    %v3023 = vrot.slane %v3009, %v3022
    %v3024 = vcombine.low %v1173, %v1205
    %v3025 = vcombine.high %v1173, %v1205
    %v3027 = vunpack.c.l.s4 1983009808
    %v3028 = vunpack.c.0.s8 %v3027
    %v3029 = vlaneseq
    %v3030 = vshrl.u32 %v3029, 7
    %v3031 = vsub.s32 %v3028, %v3030
    %v3032 = vrot.slane %v3024, %v3031
    %v3034 = vunpack.c.l.s4 1983009808
    %v3035 = vunpack.c.0.s8 %v3034
    %v3036 = vlaneseq
    %v3037 = vshrl.u32 %v3036, 7
    %v3038 = vsub.s32 %v3035, %v3037
    %v3039 = vrot.slane %v3025, %v3038
    %v3040 = vcombine.low %v1189, %v1221
    %v3041 = vcombine.high %v1189, %v1221
    %v3043 = vunpack.c.l.s4 1983009808
    %v3044 = vunpack.c.0.s8 %v3043
    %v3045 = vlaneseq
    %v3046 = vshrl.u32 %v3045, 7
    %v3047 = vsub.s32 %v3044, %v3046
    %v3048 = vrot.slane %v3040, %v3047
    %v3050 = vunpack.c.l.s4 1983009808
    %v3051 = vunpack.c.0.s8 %v3050
    %v3052 = vlaneseq
    %v3053 = vshrl.u32 %v3052, 7
    %v3054 = vsub.s32 %v3051, %v3053
    %v3055 = vrot.slane %v3041, %v3054
    %v3056 = vcombine.low %v3000, %v3016
    %v3057 = vcombine.high %v3000, %v3016
    %v3059 = vunpack.c.l.s4 1934713408
    %v3060 = vunpack.c.0.s8 %v3059
    %v3061 = vlaneseq
    %v3062 = vshrl.u32 %v3061, 7
    %v3063 = vsub.s32 %v3060, %v3062
    %v3064 = vrot.slane %v3056, %v3063
    %v3066 = vunpack.c.l.s4 1934713408
    %v3067 = vunpack.c.0.s8 %v3066
    %v3068 = vlaneseq
    %v3069 = vshrl.u32 %v3068, 7
    %v3070 = vsub.s32 %v3067, %v3069
    %v3071 = vrot.slane %v3057, %v3070
    %v3072 = vcombine.low %v3007, %v3023
    %v3073 = vcombine.high %v3007, %v3023
    %v3075 = vunpack.c.l.s4 1934713408
    %v3076 = vunpack.c.0.s8 %v3075
    %v3077 = vlaneseq
    %v3078 = vshrl.u32 %v3077, 7
    %v3079 = vsub.s32 %v3076, %v3078
    %v3080 = vrot.slane %v3072, %v3079
    %v3082 = vunpack.c.l.s4 1934713408
    %v3083 = vunpack.c.0.s8 %v3082
    %v3084 = vlaneseq
    %v3085 = vshrl.u32 %v3084, 7
    %v3086 = vsub.s32 %v3083, %v3085
    %v3087 = vrot.slane %v3073, %v3086
    %v3088 = vcombine.low %v3032, %v3048
    %v3089 = vcombine.high %v3032, %v3048
    %v3091 = vunpack.c.l.s4 1934713408
    %v3092 = vunpack.c.0.s8 %v3091
    %v3093 = vlaneseq
    %v3094 = vshrl.u32 %v3093, 7
    %v3095 = vsub.s32 %v3092, %v3094
    %v3096 = vrot.slane %v3088, %v3095
    %v3098 = vunpack.c.l.s4 1934713408
    %v3099 = vunpack.c.0.s8 %v3098
    %v3100 = vlaneseq
    %v3101 = vshrl.u32 %v3100, 7
    %v3102 = vsub.s32 %v3099, %v3101
    %v3103 = vrot.slane %v3089, %v3102
    %v3104 = vcombine.low %v3039, %v3055
    %v3105 = vcombine.high %v3039, %v3055
    %v3107 = vunpack.c.l.s4 1934713408
    %v3108 = vunpack.c.0.s8 %v3107
    %v3109 = vlaneseq
    %v3110 = vshrl.u32 %v3109, 7
    %v3111 = vsub.s32 %v3108, %v3110
    %v3112 = vrot.slane %v3104, %v3111
    %v3114 = vunpack.c.l.s4 1934713408
    %v3115 = vunpack.c.0.s8 %v3114
    %v3116 = vlaneseq
    %v3117 = vshrl.u32 %v3116, 7
    %v3118 = vsub.s32 %v3115, %v3117
    %v3119 = vrot.slane %v3105, %v3118
    %v3120 = vcombine.low %v3064, %v3096
    %v3121 = vcombine.high %v3064, %v3096
    %v3122 = vcombine.low %v3071, %v3103
    %v3123 = vcombine.high %v3071, %v3103
    %v3124 = vcombine.low %v3080, %v3112
    %v3125 = vcombine.high %v3080, %v3112
    %v3126 = vcombine.low %v3087, %v3119
    %v3127 = vcombine.high %v3087, %v3119
    %v3128 = vcombine.low %v1110, %v1142
    %v3129 = vcombine.high %v1110, %v1142
    %v3131 = vunpack.c.l.s4 1983009808
    %v3132 = vunpack.c.0.s8 %v3131
    %v3133 = vlaneseq
    %v3134 = vshrl.u32 %v3133, 7
    %v3135 = vsub.s32 %v3132, %v3134
    %v3136 = vrot.slane %v3128, %v3135
    %v3138 = vunpack.c.l.s4 1983009808
    %v3139 = vunpack.c.0.s8 %v3138
    %v3140 = vlaneseq
    %v3141 = vshrl.u32 %v3140, 7
    %v3142 = vsub.s32 %v3139, %v3141
    %v3143 = vrot.slane %v3129, %v3142
    %v3144 = vcombine.low %v1126, %v1158
    %v3145 = vcombine.high %v1126, %v1158
    %v3147 = vunpack.c.l.s4 1983009808
    %v3148 = vunpack.c.0.s8 %v3147
    %v3149 = vlaneseq
    %v3150 = vshrl.u32 %v3149, 7
    %v3151 = vsub.s32 %v3148, %v3150
    %v3152 = vrot.slane %v3144, %v3151
    %v3154 = vunpack.c.l.s4 1983009808
    %v3155 = vunpack.c.0.s8 %v3154
    %v3156 = vlaneseq
    %v3157 = vshrl.u32 %v3156, 7
    %v3158 = vsub.s32 %v3155, %v3157
    %v3159 = vrot.slane %v3145, %v3158
    %v3160 = vcombine.low %v1174, %v1206
    %v3161 = vcombine.high %v1174, %v1206
    %v3163 = vunpack.c.l.s4 1983009808
    %v3164 = vunpack.c.0.s8 %v3163
    %v3165 = vlaneseq
    %v3166 = vshrl.u32 %v3165, 7
    %v3167 = vsub.s32 %v3164, %v3166
    %v3168 = vrot.slane %v3160, %v3167
    %v3170 = vunpack.c.l.s4 1983009808
    %v3171 = vunpack.c.0.s8 %v3170
    %v3172 = vlaneseq
    %v3173 = vshrl.u32 %v3172, 7
    %v3174 = vsub.s32 %v3171, %v3173
    %v3175 = vrot.slane %v3161, %v3174
    %v3176 = vcombine.low %v1190, %v1222
    %v3177 = vcombine.high %v1190, %v1222
    %v3179 = vunpack.c.l.s4 1983009808
    %v3180 = vunpack.c.0.s8 %v3179
    %v3181 = vlaneseq
    %v3182 = vshrl.u32 %v3181, 7
    %v3183 = vsub.s32 %v3180, %v3182
    %v3184 = vrot.slane %v3176, %v3183
    %v3186 = vunpack.c.l.s4 1983009808
    %v3187 = vunpack.c.0.s8 %v3186
    %v3188 = vlaneseq
    %v3189 = vshrl.u32 %v3188, 7
    %v3190 = vsub.s32 %v3187, %v3189
    %v3191 = vrot.slane %v3177, %v3190
    %v3192 = vcombine.low %v3136, %v3152
    %v3193 = vcombine.high %v3136, %v3152
    %v3195 = vunpack.c.l.s4 1934713408
    %v3196 = vunpack.c.0.s8 %v3195
    %v3197 = vlaneseq
    %v3198 = vshrl.u32 %v3197, 7
    %v3199 = vsub.s32 %v3196, %v3198
    %v3200 = vrot.slane %v3192, %v3199
    %v3202 = vunpack.c.l.s4 1934713408
    %v3203 = vunpack.c.0.s8 %v3202
    %v3204 = vlaneseq
    %v3205 = vshrl.u32 %v3204, 7
    %v3206 = vsub.s32 %v3203, %v3205
    %v3207 = vrot.slane %v3193, %v3206
    %v3208 = vcombine.low %v3143, %v3159
    %v3209 = vcombine.high %v3143, %v3159
    %v3211 = vunpack.c.l.s4 1934713408
    %v3212 = vunpack.c.0.s8 %v3211
    %v3213 = vlaneseq
    %v3214 = vshrl.u32 %v3213, 7
    %v3215 = vsub.s32 %v3212, %v3214
    %v3216 = vrot.slane %v3208, %v3215
    %v3218 = vunpack.c.l.s4 1934713408
    %v3219 = vunpack.c.0.s8 %v3218
    %v3220 = vlaneseq
    %v3221 = vshrl.u32 %v3220, 7
    %v3222 = vsub.s32 %v3219, %v3221
    %v3223 = vrot.slane %v3209, %v3222
    %v3224 = vcombine.low %v3168, %v3184
    %v3225 = vcombine.high %v3168, %v3184
    %v3227 = vunpack.c.l.s4 1934713408
    %v3228 = vunpack.c.0.s8 %v3227
    %v3229 = vlaneseq
    %v3230 = vshrl.u32 %v3229, 7
    %v3231 = vsub.s32 %v3228, %v3230
    %v3232 = vrot.slane %v3224, %v3231
    %v3234 = vunpack.c.l.s4 1934713408
    %v3235 = vunpack.c.0.s8 %v3234
    %v3236 = vlaneseq
    %v3237 = vshrl.u32 %v3236, 7
    %v3238 = vsub.s32 %v3235, %v3237
    %v3239 = vrot.slane %v3225, %v3238
    %v3240 = vcombine.low %v3175, %v3191
    %v3241 = vcombine.high %v3175, %v3191
    %v3243 = vunpack.c.l.s4 1934713408
    %v3244 = vunpack.c.0.s8 %v3243
    %v3245 = vlaneseq
    %v3246 = vshrl.u32 %v3245, 7
    %v3247 = vsub.s32 %v3244, %v3246
    %v3248 = vrot.slane %v3240, %v3247
    %v3250 = vunpack.c.l.s4 1934713408
    %v3251 = vunpack.c.0.s8 %v3250
    %v3252 = vlaneseq
    %v3253 = vshrl.u32 %v3252, 7
    %v3254 = vsub.s32 %v3251, %v3253
    %v3255 = vrot.slane %v3241, %v3254
    %v3256 = vcombine.low %v3200, %v3232
    %v3257 = vcombine.high %v3200, %v3232
    %v3258 = vcombine.low %v3207, %v3239
    %v3259 = vcombine.high %v3207, %v3239
    %v3260 = vcombine.low %v3216, %v3248
    %v3261 = vcombine.high %v3216, %v3248
    %v3262 = vcombine.low %v3223, %v3255
    %v3263 = vcombine.high %v3223, %v3255
    %v3264 = vcombine.low %v1111, %v1143
    %v3265 = vcombine.high %v1111, %v1143
    %v3267 = vunpack.c.l.s4 1983009808
    %v3268 = vunpack.c.0.s8 %v3267
    %v3269 = vlaneseq
    %v3270 = vshrl.u32 %v3269, 7
    %v3271 = vsub.s32 %v3268, %v3270
    %v3272 = vrot.slane %v3264, %v3271
    %v3274 = vunpack.c.l.s4 1983009808
    %v3275 = vunpack.c.0.s8 %v3274
    %v3276 = vlaneseq
    %v3277 = vshrl.u32 %v3276, 7
    %v3278 = vsub.s32 %v3275, %v3277
    %v3279 = vrot.slane %v3265, %v3278
    %v3280 = vcombine.low %v1127, %v1159
    %v3281 = vcombine.high %v1127, %v1159
    %v3283 = vunpack.c.l.s4 1983009808
    %v3284 = vunpack.c.0.s8 %v3283
    %v3285 = vlaneseq
    %v3286 = vshrl.u32 %v3285, 7
    %v3287 = vsub.s32 %v3284, %v3286
    %v3288 = vrot.slane %v3280, %v3287
    %v3290 = vunpack.c.l.s4 1983009808
    %v3291 = vunpack.c.0.s8 %v3290
    %v3292 = vlaneseq
    %v3293 = vshrl.u32 %v3292, 7
    %v3294 = vsub.s32 %v3291, %v3293
    %v3295 = vrot.slane %v3281, %v3294
    %v3296 = vcombine.low %v1175, %v1207
    %v3297 = vcombine.high %v1175, %v1207
    %v3299 = vunpack.c.l.s4 1983009808
    %v3300 = vunpack.c.0.s8 %v3299
    %v3301 = vlaneseq
    %v3302 = vshrl.u32 %v3301, 7
    %v3303 = vsub.s32 %v3300, %v3302
    %v3304 = vrot.slane %v3296, %v3303
    %v3306 = vunpack.c.l.s4 1983009808
    %v3307 = vunpack.c.0.s8 %v3306
    %v3308 = vlaneseq
    %v3309 = vshrl.u32 %v3308, 7
    %v3310 = vsub.s32 %v3307, %v3309
    %v3311 = vrot.slane %v3297, %v3310
    %v3312 = vcombine.low %v1191, %v1223
    %v3313 = vcombine.high %v1191, %v1223
    %v3315 = vunpack.c.l.s4 1983009808
    %v3316 = vunpack.c.0.s8 %v3315
    %v3317 = vlaneseq
    %v3318 = vshrl.u32 %v3317, 7
    %v3319 = vsub.s32 %v3316, %v3318
    %v3320 = vrot.slane %v3312, %v3319
    %v3322 = vunpack.c.l.s4 1983009808
    %v3323 = vunpack.c.0.s8 %v3322
    %v3324 = vlaneseq
    %v3325 = vshrl.u32 %v3324, 7
    %v3326 = vsub.s32 %v3323, %v3325
    %v3327 = vrot.slane %v3313, %v3326
    %v3328 = vcombine.low %v3272, %v3288
    %v3329 = vcombine.high %v3272, %v3288
    %v3331 = vunpack.c.l.s4 1934713408
    %v3332 = vunpack.c.0.s8 %v3331
    %v3333 = vlaneseq
    %v3334 = vshrl.u32 %v3333, 7
    %v3335 = vsub.s32 %v3332, %v3334
    %v3336 = vrot.slane %v3328, %v3335
    %v3338 = vunpack.c.l.s4 1934713408
    %v3339 = vunpack.c.0.s8 %v3338
    %v3340 = vlaneseq
    %v3341 = vshrl.u32 %v3340, 7
    %v3342 = vsub.s32 %v3339, %v3341
    %v3343 = vrot.slane %v3329, %v3342
    %v3344 = vcombine.low %v3279, %v3295
    %v3345 = vcombine.high %v3279, %v3295
    %v3347 = vunpack.c.l.s4 1934713408
    %v3348 = vunpack.c.0.s8 %v3347
    %v3349 = vlaneseq
    %v3350 = vshrl.u32 %v3349, 7
    %v3351 = vsub.s32 %v3348, %v3350
    %v3352 = vrot.slane %v3344, %v3351
    %v3354 = vunpack.c.l.s4 1934713408
    %v3355 = vunpack.c.0.s8 %v3354
    %v3356 = vlaneseq
    %v3357 = vshrl.u32 %v3356, 7
    %v3358 = vsub.s32 %v3355, %v3357
    %v3359 = vrot.slane %v3345, %v3358
    %v3360 = vcombine.low %v3304, %v3320
    %v3361 = vcombine.high %v3304, %v3320
    %v3363 = vunpack.c.l.s4 1934713408
    %v3364 = vunpack.c.0.s8 %v3363
    %v3365 = vlaneseq
    %v3366 = vshrl.u32 %v3365, 7
    %v3367 = vsub.s32 %v3364, %v3366
    %v3368 = vrot.slane %v3360, %v3367
    %v3370 = vunpack.c.l.s4 1934713408
    %v3371 = vunpack.c.0.s8 %v3370
    %v3372 = vlaneseq
    %v3373 = vshrl.u32 %v3372, 7
    %v3374 = vsub.s32 %v3371, %v3373
    %v3375 = vrot.slane %v3361, %v3374
    %v3376 = vcombine.low %v3311, %v3327
    %v3377 = vcombine.high %v3311, %v3327
    %v3379 = vunpack.c.l.s4 1934713408
    %v3380 = vunpack.c.0.s8 %v3379
    %v3381 = vlaneseq
    %v3382 = vshrl.u32 %v3381, 7
    %v3383 = vsub.s32 %v3380, %v3382
    %v3384 = vrot.slane %v3376, %v3383
    %v3386 = vunpack.c.l.s4 1934713408
    %v3387 = vunpack.c.0.s8 %v3386
    %v3388 = vlaneseq
    %v3389 = vshrl.u32 %v3388, 7
    %v3390 = vsub.s32 %v3387, %v3389
    %v3391 = vrot.slane %v3377, %v3390
    %v3392 = vcombine.low %v3336, %v3368
    %v3393 = vcombine.high %v3336, %v3368
    %v3394 = vcombine.low %v3343, %v3375
    %v3395 = vcombine.high %v3343, %v3375
    %v3396 = vcombine.low %v3352, %v3384
    %v3397 = vcombine.high %v3352, %v3384
    %v3398 = vcombine.low %v3359, %v3391
    %v3399 = vcombine.high %v3359, %v3391
    %3401 = vrot.lane.b32.xlu0 %v1353, 2
    %v3402 = vpop.permute.xlu0 %3401
    %3405 = vrot.lane.b32.xlu0 %v1354, 4
    %v3406 = vpop.permute.xlu0 %3405
    %3409 = vrot.lane.b32.xlu0 %v1355, 6
    %v3410 = vpop.permute.xlu0 %3409
    %3413 = vrot.lane.b32.xlu0 %v1356, 8
    %v3414 = vpop.permute.xlu0 %3413
    %3417 = vrot.lane.b32.xlu0 %v1357, 10
    %v3418 = vpop.permute.xlu0 %3417
    %3421 = vrot.lane.b32.xlu0 %v1358, 12
    %v3422 = vpop.permute.xlu0 %3421
    %3425 = vrot.lane.b32.xlu0 %v1359, 14
    %v3426 = vpop.permute.xlu0 %3425
    %3429 = vrot.lane.b32.xlu0 %v1488, 16
    %v3430 = vpop.permute.xlu0 %3429
    %3433 = vrot.lane.b32.xlu0 %v1489, 18
    %v3434 = vpop.permute.xlu0 %3433
    %3437 = vrot.lane.b32.xlu0 %v1490, 20
    %v3438 = vpop.permute.xlu0 %3437
    %3441 = vrot.lane.b32.xlu0 %v1491, 22
    %v3442 = vpop.permute.xlu0 %3441
    %3445 = vrot.lane.b32.xlu0 %v1492, 24
    %v3446 = vpop.permute.xlu0 %3445
    %3449 = vrot.lane.b32.xlu0 %v1493, 26
    %v3450 = vpop.permute.xlu0 %3449
    %3453 = vrot.lane.b32.xlu0 %v1494, 28
    %v3454 = vpop.permute.xlu0 %3453
    %3457 = vrot.lane.b32.xlu0 %v1495, 30
    %v3458 = vpop.permute.xlu0 %3457
    %3461 = vrot.lane.b32.xlu0 %v1624, 32
    %v3462 = vpop.permute.xlu0 %3461
    %3465 = vrot.lane.b32.xlu0 %v1625, 34
    %v3466 = vpop.permute.xlu0 %3465
    %3469 = vrot.lane.b32.xlu0 %v1626, 36
    %v3470 = vpop.permute.xlu0 %3469
    %3473 = vrot.lane.b32.xlu0 %v1627, 38
    %v3474 = vpop.permute.xlu0 %3473
    %3477 = vrot.lane.b32.xlu0 %v1628, 40
    %v3478 = vpop.permute.xlu0 %3477
    %3481 = vrot.lane.b32.xlu0 %v1629, 42
    %v3482 = vpop.permute.xlu0 %3481
    %3485 = vrot.lane.b32.xlu0 %v1630, 44
    %v3486 = vpop.permute.xlu0 %3485
    %3489 = vrot.lane.b32.xlu0 %v1631, 46
    %v3490 = vpop.permute.xlu0 %3489
    %3493 = vrot.lane.b32.xlu0 %v1760, 48
    %v3494 = vpop.permute.xlu0 %3493
    %3497 = vrot.lane.b32.xlu0 %v1761, 50
    %v3498 = vpop.permute.xlu0 %3497
    %3501 = vrot.lane.b32.xlu0 %v1762, 52
    %v3502 = vpop.permute.xlu0 %3501
    %3505 = vrot.lane.b32.xlu0 %v1763, 54
    %v3506 = vpop.permute.xlu0 %3505
    %3509 = vrot.lane.b32.xlu0 %v1764, 56
    %v3510 = vpop.permute.xlu0 %3509
    %3513 = vrot.lane.b32.xlu0 %v1765, 58
    %v3514 = vpop.permute.xlu0 %3513
    %3517 = vrot.lane.b32.xlu0 %v1766, 60
    %v3518 = vpop.permute.xlu0 %3517
    %3521 = vrot.lane.b32.xlu0 %v1767, 62
    %v3522 = vpop.permute.xlu0 %3521
    %3525 = vrot.lane.b32.xlu0 %v1896, 64
    %v3526 = vpop.permute.xlu0 %3525
    %3529 = vrot.lane.b32.xlu0 %v1897, 66
    %v3530 = vpop.permute.xlu0 %3529
    %3533 = vrot.lane.b32.xlu0 %v1898, 68
    %v3534 = vpop.permute.xlu0 %3533
    %3537 = vrot.lane.b32.xlu0 %v1899, 70
    %v3538 = vpop.permute.xlu0 %3537
    %3541 = vrot.lane.b32.xlu0 %v1900, 72
    %v3542 = vpop.permute.xlu0 %3541
    %3545 = vrot.lane.b32.xlu0 %v1901, 74
    %v3546 = vpop.permute.xlu0 %3545
    %3549 = vrot.lane.b32.xlu0 %v1902, 76
    %v3550 = vpop.permute.xlu0 %3549
    %3553 = vrot.lane.b32.xlu0 %v1903, 78
    %v3554 = vpop.permute.xlu0 %3553
    %3557 = vrot.lane.b32.xlu0 %v2032, 80
    %v3558 = vpop.permute.xlu0 %3557
    %3561 = vrot.lane.b32.xlu0 %v2033, 82
    %v3562 = vpop.permute.xlu0 %3561
    %3565 = vrot.lane.b32.xlu0 %v2034, 84
    %v3566 = vpop.permute.xlu0 %3565
    %3569 = vrot.lane.b32.xlu0 %v2035, 86
    %v3570 = vpop.permute.xlu0 %3569
    %3573 = vrot.lane.b32.xlu0 %v2036, 88
    %v3574 = vpop.permute.xlu0 %3573
    %3577 = vrot.lane.b32.xlu0 %v2037, 90
    %v3578 = vpop.permute.xlu0 %3577
    %3581 = vrot.lane.b32.xlu0 %v2038, 92
    %v3582 = vpop.permute.xlu0 %3581
    %3585 = vrot.lane.b32.xlu0 %v2039, 94
    %v3586 = vpop.permute.xlu0 %3585
    %3589 = vrot.lane.b32.xlu0 %v2168, 96
    %v3590 = vpop.permute.xlu0 %3589
    %3593 = vrot.lane.b32.xlu0 %v2169, 98
    %v3594 = vpop.permute.xlu0 %3593
    %3597 = vrot.lane.b32.xlu0 %v2170, 100
    %v3598 = vpop.permute.xlu0 %3597
    %3601 = vrot.lane.b32.xlu0 %v2171, 102
    %v3602 = vpop.permute.xlu0 %3601
    %3605 = vrot.lane.b32.xlu0 %v2172, 104
    %v3606 = vpop.permute.xlu0 %3605
    %3609 = vrot.lane.b32.xlu0 %v2173, 106
    %v3610 = vpop.permute.xlu0 %3609
    %3613 = vrot.lane.b32.xlu0 %v2174, 108
    %v3614 = vpop.permute.xlu0 %3613
    %3617 = vrot.lane.b32.xlu0 %v2175, 110
    %v3618 = vpop.permute.xlu0 %3617
    %3621 = vrot.lane.b32.xlu0 %v2304, 112
    %v3622 = vpop.permute.xlu0 %3621
    %3625 = vrot.lane.b32.xlu0 %v2305, 114
    %v3626 = vpop.permute.xlu0 %3625
    %3629 = vrot.lane.b32.xlu0 %v2306, 116
    %v3630 = vpop.permute.xlu0 %3629
    %3633 = vrot.lane.b32.xlu0 %v2307, 118
    %v3634 = vpop.permute.xlu0 %3633
    %3637 = vrot.lane.b32.xlu0 %v2308, 120
    %v3638 = vpop.permute.xlu0 %3637
    %3641 = vrot.lane.b32.xlu0 %v2309, 122
    %v3642 = vpop.permute.xlu0 %3641
    %3645 = vrot.lane.b32.xlu0 %v2310, 124
    %v3646 = vpop.permute.xlu0 %3645
    %3649 = vrot.lane.b32.xlu0 %v2311, 126
    %v3650 = vpop.permute.xlu0 %3649
    %3653 = vrot.lane.b32.xlu0 %v2441, 2
    %v3654 = vpop.permute.xlu0 %3653
    %3657 = vrot.lane.b32.xlu0 %v2442, 4
    %v3658 = vpop.permute.xlu0 %3657
    %3661 = vrot.lane.b32.xlu0 %v2443, 6
    %v3662 = vpop.permute.xlu0 %3661
    %3665 = vrot.lane.b32.xlu0 %v2444, 8
    %v3666 = vpop.permute.xlu0 %3665
    %3669 = vrot.lane.b32.xlu0 %v2445, 10
    %v3670 = vpop.permute.xlu0 %3669
    %3673 = vrot.lane.b32.xlu0 %v2446, 12
    %v3674 = vpop.permute.xlu0 %3673
    %3677 = vrot.lane.b32.xlu0 %v2447, 14
    %v3678 = vpop.permute.xlu0 %3677
    %3681 = vrot.lane.b32.xlu0 %v2576, 16
    %v3682 = vpop.permute.xlu0 %3681
    %3685 = vrot.lane.b32.xlu0 %v2577, 18
    %v3686 = vpop.permute.xlu0 %3685
    %3689 = vrot.lane.b32.xlu0 %v2578, 20
    %v3690 = vpop.permute.xlu0 %3689
    %3693 = vrot.lane.b32.xlu0 %v2579, 22
    %v3694 = vpop.permute.xlu0 %3693
    %3697 = vrot.lane.b32.xlu0 %v2580, 24
    %v3698 = vpop.permute.xlu0 %3697
    %3701 = vrot.lane.b32.xlu0 %v2581, 26
    %v3702 = vpop.permute.xlu0 %3701
    %3705 = vrot.lane.b32.xlu0 %v2582, 28
    %v3706 = vpop.permute.xlu0 %3705
    %3709 = vrot.lane.b32.xlu0 %v2583, 30
    %v3710 = vpop.permute.xlu0 %3709
    %3713 = vrot.lane.b32.xlu0 %v2712, 32
    %v3714 = vpop.permute.xlu0 %3713
    %3717 = vrot.lane.b32.xlu0 %v2713, 34
    %v3718 = vpop.permute.xlu0 %3717
    %3721 = vrot.lane.b32.xlu0 %v2714, 36
    %v3722 = vpop.permute.xlu0 %3721
    %3725 = vrot.lane.b32.xlu0 %v2715, 38
    %v3726 = vpop.permute.xlu0 %3725
    %3729 = vrot.lane.b32.xlu0 %v2716, 40
    %v3730 = vpop.permute.xlu0 %3729
    %3733 = vrot.lane.b32.xlu0 %v2717, 42
    %v3734 = vpop.permute.xlu0 %3733
    %3737 = vrot.lane.b32.xlu0 %v2718, 44
    %v3738 = vpop.permute.xlu0 %3737
    %3741 = vrot.lane.b32.xlu0 %v2719, 46
    %v3742 = vpop.permute.xlu0 %3741
    %3745 = vrot.lane.b32.xlu0 %v2848, 48
    %v3746 = vpop.permute.xlu0 %3745
    %3749 = vrot.lane.b32.xlu0 %v2849, 50
    %v3750 = vpop.permute.xlu0 %3749
    %3753 = vrot.lane.b32.xlu0 %v2850, 52
    %v3754 = vpop.permute.xlu0 %3753
    %3757 = vrot.lane.b32.xlu0 %v2851, 54
    %v3758 = vpop.permute.xlu0 %3757
    %3761 = vrot.lane.b32.xlu0 %v2852, 56
    %v3762 = vpop.permute.xlu0 %3761
    %3765 = vrot.lane.b32.xlu0 %v2853, 58
    %v3766 = vpop.permute.xlu0 %3765
    %3769 = vrot.lane.b32.xlu0 %v2854, 60
    %v3770 = vpop.permute.xlu0 %3769
    %3773 = vrot.lane.b32.xlu0 %v2855, 62
    %v3774 = vpop.permute.xlu0 %3773
    %3777 = vrot.lane.b32.xlu0 %v2984, 64
    %v3778 = vpop.permute.xlu0 %3777
    %3781 = vrot.lane.b32.xlu0 %v2985, 66
    %v3782 = vpop.permute.xlu0 %3781
    %3785 = vrot.lane.b32.xlu0 %v2986, 68
    %v3786 = vpop.permute.xlu0 %3785
    %3789 = vrot.lane.b32.xlu0 %v2987, 70
    %v3790 = vpop.permute.xlu0 %3789
    %3793 = vrot.lane.b32.xlu0 %v2988, 72
    %v3794 = vpop.permute.xlu0 %3793
    %3797 = vrot.lane.b32.xlu0 %v2989, 74
    %v3798 = vpop.permute.xlu0 %3797
    %3801 = vrot.lane.b32.xlu0 %v2990, 76
    %v3802 = vpop.permute.xlu0 %3801
    %3805 = vrot.lane.b32.xlu0 %v2991, 78
    %v3806 = vpop.permute.xlu0 %3805
    %3809 = vrot.lane.b32.xlu0 %v3120, 80
    %v3810 = vpop.permute.xlu0 %3809
    %3813 = vrot.lane.b32.xlu0 %v3121, 82
    %v3814 = vpop.permute.xlu0 %3813
    %3817 = vrot.lane.b32.xlu0 %v3122, 84
    %v3818 = vpop.permute.xlu0 %3817
    %3821 = vrot.lane.b32.xlu0 %v3123, 86
    %v3822 = vpop.permute.xlu0 %3821
    %3825 = vrot.lane.b32.xlu0 %v3124, 88
    %v3826 = vpop.permute.xlu0 %3825
    %3829 = vrot.lane.b32.xlu0 %v3125, 90
    %v3830 = vpop.permute.xlu0 %3829
    %3833 = vrot.lane.b32.xlu0 %v3126, 92
    %v3834 = vpop.permute.xlu0 %3833
    %3837 = vrot.lane.b32.xlu0 %v3127, 94
    %v3838 = vpop.permute.xlu0 %3837
    %3841 = vrot.lane.b32.xlu0 %v3256, 96
    %v3842 = vpop.permute.xlu0 %3841
    %3845 = vrot.lane.b32.xlu0 %v3257, 98
    %v3846 = vpop.permute.xlu0 %3845
    %3849 = vrot.lane.b32.xlu0 %v3258, 100
    %v3850 = vpop.permute.xlu0 %3849
    %3853 = vrot.lane.b32.xlu0 %v3259, 102
    %v3854 = vpop.permute.xlu0 %3853
    %3857 = vrot.lane.b32.xlu0 %v3260, 104
    %v3858 = vpop.permute.xlu0 %3857
    %3861 = vrot.lane.b32.xlu0 %v3261, 106
    %v3862 = vpop.permute.xlu0 %3861
    %3865 = vrot.lane.b32.xlu0 %v3262, 108
    %v3866 = vpop.permute.xlu0 %3865
    %3869 = vrot.lane.b32.xlu0 %v3263, 110
    %v3870 = vpop.permute.xlu0 %3869
    %3873 = vrot.lane.b32.xlu0 %v3392, 112
    %v3874 = vpop.permute.xlu0 %3873
    %3877 = vrot.lane.b32.xlu0 %v3393, 114
    %v3878 = vpop.permute.xlu0 %3877
    %3881 = vrot.lane.b32.xlu0 %v3394, 116
    %v3882 = vpop.permute.xlu0 %3881
    %3885 = vrot.lane.b32.xlu0 %v3395, 118
    %v3886 = vpop.permute.xlu0 %3885
    %3889 = vrot.lane.b32.xlu0 %v3396, 120
    %v3890 = vpop.permute.xlu0 %3889
    %3893 = vrot.lane.b32.xlu0 %v3397, 122
    %v3894 = vpop.permute.xlu0 %3893
    %3897 = vrot.lane.b32.xlu0 %v3398, 124
    %v3898 = vpop.permute.xlu0 %3897
    %3901 = vrot.lane.b32.xlu0 %v3399, 126
    %v3902 = vpop.permute.xlu0 %3901
    %vm3904 = vcmask 15360
    %v3905 = vsel %vm3904, %v1352, %v3402
    %vm3906 = vcmask 31744
    %v3907 = vsel %vm3906, %v3905, %v3406
    %vm3908 = vcmask 48128
    %v3909 = vsel %vm3908, %v3907, %v3410
    %vm3910 = vcmask 64512
    %v3911 = vsel %vm3910, %v3909, %v3414
    %vm3912 = vcmask 80896
    %v3913 = vsel %vm3912, %v3911, %v3418
    %vm3914 = vcmask 97280
    %v3915 = vsel %vm3914, %v3913, %v3422
    %vm3916 = vcmask 113664
    %v3917 = vsel %vm3916, %v3915, %v3426
    %vm3918 = vcmask 130048
    %v3919 = vsel %vm3918, %v3917, %v3430
    %vm3920 = vcmask 146432
    %v3921 = vsel %vm3920, %v3919, %v3434
    %vm3922 = vcmask 162816
    %v3923 = vsel %vm3922, %v3921, %v3438
    %vm3924 = vcmask 179200
    %v3925 = vsel %vm3924, %v3923, %v3442
    %vm3926 = vcmask 195584
    %v3927 = vsel %vm3926, %v3925, %v3446
    %vm3928 = vcmask 211968
    %v3929 = vsel %vm3928, %v3927, %v3450
    %vm3930 = vcmask 228352
    %v3931 = vsel %vm3930, %v3929, %v3454
    %vm3932 = vcmask 244736
    %v3933 = vsel %vm3932, %v3931, %v3458
    %vm3934 = vcmask 261120
    %v3935 = vsel %vm3934, %v3933, %v3462
    %vm3936 = vcmask 277504
    %v3937 = vsel %vm3936, %v3935, %v3466
    %vm3938 = vcmask 293888
    %v3939 = vsel %vm3938, %v3937, %v3470
    %vm3940 = vcmask 310272
    %v3941 = vsel %vm3940, %v3939, %v3474
    %vm3942 = vcmask 326656
    %v3943 = vsel %vm3942, %v3941, %v3478
    %vm3944 = vcmask 343040
    %v3945 = vsel %vm3944, %v3943, %v3482
    %vm3946 = vcmask 359424
    %v3947 = vsel %vm3946, %v3945, %v3486
    %vm3948 = vcmask 375808
    %v3949 = vsel %vm3948, %v3947, %v3490
    %vm3950 = vcmask 392192
    %v3951 = vsel %vm3950, %v3949, %v3494
    %vm3952 = vcmask 408576
    %v3953 = vsel %vm3952, %v3951, %v3498
    %vm3954 = vcmask 424960
    %v3955 = vsel %vm3954, %v3953, %v3502
    %vm3956 = vcmask 441344
    %v3957 = vsel %vm3956, %v3955, %v3506
    %vm3958 = vcmask 457728
    %v3959 = vsel %vm3958, %v3957, %v3510
    %vm3960 = vcmask 474112
    %v3961 = vsel %vm3960, %v3959, %v3514
    %vm3962 = vcmask 490496
    %v3963 = vsel %vm3962, %v3961, %v3518
    %vm3964 = vcmask 506880
    %v3965 = vsel %vm3964, %v3963, %v3522
    %vm3966 = vcmask 523264
    %v3967 = vsel %vm3966, %v3965, %v3526
    %vm3968 = vcmask 539648
    %v3969 = vsel %vm3968, %v3967, %v3530
    %vm3970 = vcmask 556032
    %v3971 = vsel %vm3970, %v3969, %v3534
    %vm3972 = vcmask 572416
    %v3973 = vsel %vm3972, %v3971, %v3538
    %vm3974 = vcmask 588800
    %v3975 = vsel %vm3974, %v3973, %v3542
    %vm3976 = vcmask 605184
    %v3977 = vsel %vm3976, %v3975, %v3546
    %vm3978 = vcmask 621568
    %v3979 = vsel %vm3978, %v3977, %v3550
    %vm3980 = vcmask 637952
    %v3981 = vsel %vm3980, %v3979, %v3554
    %vm3982 = vcmask 654336
    %v3983 = vsel %vm3982, %v3981, %v3558
    %vm3984 = vcmask 670720
    %v3985 = vsel %vm3984, %v3983, %v3562
    %vm3986 = vcmask 687104
    %v3987 = vsel %vm3986, %v3985, %v3566
    %vm3988 = vcmask 703488
    %v3989 = vsel %vm3988, %v3987, %v3570
    %vm3990 = vcmask 719872
    %v3991 = vsel %vm3990, %v3989, %v3574
    %vm3992 = vcmask 736256
    %v3993 = vsel %vm3992, %v3991, %v3578
    %vm3994 = vcmask 752640
    %v3995 = vsel %vm3994, %v3993, %v3582
    %vm3996 = vcmask 769024
    %v3997 = vsel %vm3996, %v3995, %v3586
    %vm3998 = vcmask 785408
    %v3999 = vsel %vm3998, %v3997, %v3590
    %vm4000 = vcmask 801792
    %v4001 = vsel %vm4000, %v3999, %v3594
    %vm4002 = vcmask 818176
    %v4003 = vsel %vm4002, %v4001, %v3598
    %vm4004 = vcmask 834560
    %v4005 = vsel %vm4004, %v4003, %v3602
    %vm4006 = vcmask 850944
    %v4007 = vsel %vm4006, %v4005, %v3606
    %vm4008 = vcmask 867328
    %v4009 = vsel %vm4008, %v4007, %v3610
    %vm4010 = vcmask 883712
    %v4011 = vsel %vm4010, %v4009, %v3614
    %vm4012 = vcmask 900096
    %v4013 = vsel %vm4012, %v4011, %v3618
    %vm4014 = vcmask 916480
    %v4015 = vsel %vm4014, %v4013, %v3622
    %vm4016 = vcmask 932864
    %v4017 = vsel %vm4016, %v4015, %v3626
    %vm4018 = vcmask 949248
    %v4019 = vsel %vm4018, %v4017, %v3630
    %vm4020 = vcmask 965632
    %v4021 = vsel %vm4020, %v4019, %v3634
    %vm4022 = vcmask 982016
    %v4023 = vsel %vm4022, %v4021, %v3638
    %vm4024 = vcmask 998400
    %v4025 = vsel %vm4024, %v4023, %v3642
    %vm4026 = vcmask 1014784
    %v4027 = vsel %vm4026, %v4025, %v3646
    %vm4028 = vcmask 1031168
    %v4029 = vsel %vm4028, %v4027, %v3650
    %v4030 = vsel %vm3904, %v2440, %v3654
    %v4031 = vsel %vm3906, %v4030, %v3658
    %v4032 = vsel %vm3908, %v4031, %v3662
    %v4033 = vsel %vm3910, %v4032, %v3666
    %v4034 = vsel %vm3912, %v4033, %v3670
    %v4035 = vsel %vm3914, %v4034, %v3674
    %v4036 = vsel %vm3916, %v4035, %v3678
    %v4037 = vsel %vm3918, %v4036, %v3682
    %v4038 = vsel %vm3920, %v4037, %v3686
    %v4039 = vsel %vm3922, %v4038, %v3690
    %v4040 = vsel %vm3924, %v4039, %v3694
    %v4041 = vsel %vm3926, %v4040, %v3698
    %v4042 = vsel %vm3928, %v4041, %v3702
    %v4043 = vsel %vm3930, %v4042, %v3706
    %v4044 = vsel %vm3932, %v4043, %v3710
    %v4045 = vsel %vm3934, %v4044, %v3714
    %v4046 = vsel %vm3936, %v4045, %v3718
    %v4047 = vsel %vm3938, %v4046, %v3722
    %v4048 = vsel %vm3940, %v4047, %v3726
    %v4049 = vsel %vm3942, %v4048, %v3730
    %v4050 = vsel %vm3944, %v4049, %v3734
    %v4051 = vsel %vm3946, %v4050, %v3738
    %v4052 = vsel %vm3948, %v4051, %v3742
    %v4053 = vsel %vm3950, %v4052, %v3746
    %v4054 = vsel %vm3952, %v4053, %v3750
    %v4055 = vsel %vm3954, %v4054, %v3754
    %v4056 = vsel %vm3956, %v4055, %v3758
    %v4057 = vsel %vm3958, %v4056, %v3762
    %v4058 = vsel %vm3960, %v4057, %v3766
    %v4059 = vsel %vm3962, %v4058, %v3770
    %v4060 = vsel %vm3964, %v4059, %v3774
    %v4061 = vsel %vm3966, %v4060, %v3778
    %v4062 = vsel %vm3968, %v4061, %v3782
    %v4063 = vsel %vm3970, %v4062, %v3786
    %v4064 = vsel %vm3972, %v4063, %v3790
    %v4065 = vsel %vm3974, %v4064, %v3794
    %v4066 = vsel %vm3976, %v4065, %v3798
    %v4067 = vsel %vm3978, %v4066, %v3802
    %v4068 = vsel %vm3980, %v4067, %v3806
    %v4069 = vsel %vm3982, %v4068, %v3810
    %v4070 = vsel %vm3984, %v4069, %v3814
    %v4071 = vsel %vm3986, %v4070, %v3818
    %v4072 = vsel %vm3988, %v4071, %v3822
    %v4073 = vsel %vm3990, %v4072, %v3826
    %v4074 = vsel %vm3992, %v4073, %v3830
    %v4075 = vsel %vm3994, %v4074, %v3834
    %v4076 = vsel %vm3996, %v4075, %v3838
    %v4077 = vsel %vm3998, %v4076, %v3842
    %v4078 = vsel %vm4000, %v4077, %v3846
    %v4079 = vsel %vm4002, %v4078, %v3850
    %v4080 = vsel %vm4004, %v4079, %v3854
    %v4081 = vsel %vm4006, %v4080, %v3858
    %v4082 = vsel %vm4008, %v4081, %v3862
    %v4083 = vsel %vm4010, %v4082, %v3866
    %v4084 = vsel %vm4012, %v4083, %v3870
    %v4085 = vsel %vm4014, %v4084, %v3874
    %v4086 = vsel %vm4016, %v4085, %v3878
    %v4087 = vsel %vm4018, %v4086, %v3882
    %v4088 = vsel %vm4020, %v4087, %v3886
    %v4089 = vsel %vm4022, %v4088, %v3890
    %v4090 = vsel %vm4024, %v4089, %v3894
    %v4091 = vsel %vm4026, %v4090, %v3898
    %v4092 = vsel %vm4028, %v4091, %v3902
    %4093 = vst [vmem:[#allocation5] sm:$0xff] %v4029
    %4094 = vst [vmem:[#allocation5 + $0x8] sm:$0xff] %v4092
    // Predicated region
    $region10: #{tpu_custom_call.1} parent=1 // pred_check
      _
    $region11: #{tpu_custom_call.1} parent=1 // pred_check_branch
      %4096 = sbr.rel (0) target = $region13
    $region12: #{tpu_custom_call.1} parent=1 // pred_region
      %s4098 = ssub.s32 256, 256
      %4099 = vsyncadd [#allocation4], %s4098
      %s4101 = sshll.u32 [#allocation5], 4
      %s4102 = int_to_ptr.vmem [resolvable:$true] %s4101
      %4104 = dma.vmem_to_hbm [thread:$0]  %s4102, 256, %s1, [#allocation4]
    $region13: #{tpu_custom_call.1} parent=1 // pred_fallthru
      _
    // Predicated region
    $region14: #{tpu_custom_call.1} parent=1 // pred_check
      _
    $region15: #{tpu_custom_call.1} parent=1 // pred_check_branch
      %4106 = sbr.rel (0) target = $region17
    $region16: #{tpu_custom_call.1} parent=1 // pred_region
      %4107 = dma.done [#allocation4], 256
    $region17: #{tpu_custom_call.1} parent=1 // pred_fallthru
      _
    %4108 = vsyncpa [#allocation3], 1
    %4109 = vsyncpa [#allocation4], 1

// kernel: tpu_custom_call.1
$region0: #{tpu_custom_call.1}
  #allocation0 [shape = 'u32[]', space=smem, size = 0x4, offset = 0x4, fixed_abs, tag = 'smem constant byte address 0x4 - core index']
  #allocation1 [shape = 'u32[144,128]{1,0:T(1,128)}', space=vmem, size = 0x12000, scoped, tag = 'internal scratch']
  %s0 = inlined_call_operand.hbm [shape: f32[8,128], index: 0, kind: input, shape index: {}]
  %s1 = inlined_call_operand.hbm [shape: f32[2,8,128], index: 1, kind: output, shape index: {}]
  %s2 = sld [smem:[#allocation0]]
  $region18: #{tpu_custom_call.1} parent=0
    _
  %s4 = ssub.s32 1, %s2
  %s5 = scalar_select 0, %s4, %s2
  $region1: #{tpu_custom_call.1} parent=0
    #allocation2 [shape = 'u8[4096]{0}', space=vmem, size = 0x1000, scoped, tag = 'input window, operand 0, single buffered']
    #allocation3 [shape = 's32[1]{0}', space=sflag, size = 0x4, scoped, tag = 'scoped memory for tpu_custom_call.1']
    #allocation4 [shape = 's32[1]{0}', space=sflag, size = 0x4, scoped, tag = 'scoped memory for tpu_custom_call.1']
    #allocation5 [shape = 'u8[8192]{0}', space=vmem, size = 0x2000, scoped, tag = 'output window, operand 0, single buffered']
    %6 = vsyncpa [#allocation3], 0
    %7 = vsyncpa [#allocation4], 0
    // Predicated region
    $region2: #{tpu_custom_call.1} parent=1 // pred_check
      _
    $region3: #{tpu_custom_call.1} parent=1 // pred_check_branch
      %9 = sbr.rel (0) target = $region5
    $region4: #{tpu_custom_call.1} parent=1 // pred_region
      %s11 = ssub.s32 128, 128
      %12 = vsyncadd [#allocation3], %s11
      %s14 = sshll.u32 [#allocation2], 4
      %s15 = int_to_ptr.vmem [resolvable:$true] %s14
      %17 = dma.hbm_to_vmem [thread:$0]  %s0, 128, %s15, [#allocation3]
    $region5: #{tpu_custom_call.1} parent=1 // pred_fallthru
      _
    // Predicated region
    $region6: #{tpu_custom_call.1} parent=1 // pred_check
      _
    $region7: #{tpu_custom_call.1} parent=1 // pred_check_branch
      %19 = sbr.rel (0) target = $region9
    $region8: #{tpu_custom_call.1} parent=1 // pred_region
      %20 = dma.done [#allocation3], 128
    $region9: #{tpu_custom_call.1} parent=1 // pred_fallthru
      _
    %v21 = vld [vmem:[#allocation2] sm:$0xff]
    %v22 = vmul.f32 %v21, 0.5
    %23 = vst [vmem:[#allocation5] sm:$0xff] %v22
    %v24 = vmul.f32 %v21, -1.25
    %s25 = scalar_lea.vmem [#allocation5], 8
    %26 = vst [vmem:[%s25] sm:$0xff] %v24
    // Predicated region
    $region10: #{tpu_custom_call.1} parent=1 // pred_check
      _
    $region11: #{tpu_custom_call.1} parent=1 // pred_check_branch
      %28 = sbr.rel (0) target = $region13
    $region12: #{tpu_custom_call.1} parent=1 // pred_region
      %s30 = ssub.s32 256, 256
      %31 = vsyncadd [#allocation4], %s30
      %s32 = sshll.u32 [#allocation5], 4
      %s33 = int_to_ptr.vmem [resolvable:$true] %s32
      %38 = dma.vmem_to_hbm [thread:$0]  %s33, 256, %s1, [#allocation4], 128, 128, 8
    $region13: #{tpu_custom_call.1} parent=1 // pred_fallthru
      _
    // Predicated region
    $region14: #{tpu_custom_call.1} parent=1 // pred_check
      _
    $region15: #{tpu_custom_call.1} parent=1 // pred_check_branch
      %40 = sbr.rel (0) target = $region17
    $region16: #{tpu_custom_call.1} parent=1 // pred_region
      %41 = dma.done [#allocation4], 256
    $region17: #{tpu_custom_call.1} parent=1 // pred_fallthru
      _
    %42 = vsyncpa [#allocation3], 1
    %43 = vsyncpa [#allocation4], 1

</llo_original>
